<compile_context>
chip_gen: v7x
topology: tpu7x:2x2x1
jax: 0.10.0
libtpu: 0.0.40
codegen_flags: <defaults>
</compile_context>

<pallas_src>
import functools

import jax
import jax.numpy as jnp
from jax.experimental import pallas as pl
from jax.experimental.pallas import tpu as pltpu


def _layernorm(x, gamma, beta, eps=1e-5):
    mu = jnp.mean(x, axis=-1, keepdims=True)
    var = jnp.mean((x - mu) ** 2, axis=-1, keepdims=True)
    return (x - mu) * jax.lax.rsqrt(var + eps) * gamma + beta


def _erf(x):
    # Abramowitz & Stegun 7.1.26, |error| <= 1.5e-7.  Uses only exp/abs/where,
    # which lower cleanly in Mosaic; keeps nn.GELU's exact-erf semantics.
    a1, a2, a3, a4, a5 = (0.254829592, -0.284496736, 1.421413741,
                          -1.453152027, 1.061405429)
    p = 0.3275911
    ax = jnp.abs(x)
    t = 1.0 / (1.0 + p * ax)
    poly = ((((a5 * t + a4) * t + a3) * t + a2) * t + a1) * t
    y = 1.0 - poly * jnp.exp(-ax * ax)
    return jnp.where(x >= 0, y, -y)


def transformer_block_kernel(
    x_ref,                       # (block_b*L, D) token-major slab (D on lanes)
    g1_ref, b1_ref,              # (1, D)  f32                -- norm1
    wqkv_ref, bqkv_ref,          # (D, 3D) bf16, (1, 3D) f32  -- attn in_proj
    wo_ref, bo_ref,              # (D, D)  bf16, (1, D)  f32  -- attn out_proj
    wg_ref, bg_ref,              # (D, D)  bf16, (1, D)  f32  -- gate linear
    g2_ref, b2_ref,              # (1, D)  f32                -- norm2
    w1_ref, bb1_ref,             # (D, H)  bf16, (1, H)  f32  -- mlp fc1
    w2_ref, bb2_ref,             # (H, D)  bf16, (1, D)  f32  -- mlp fc2
    o_ref,                       # (block_b*L, D)
    *, num_heads, block_b, seq_len):
    T, D = x_ref.shape
    L = seq_len
    Bt = block_b
    hd = D // num_heads
    scale = 1.0 / float(hd) ** 0.5
    bf16 = jnp.bfloat16

    # ---- token-major input, residual path stays exact f32 ----
    x2 = x_ref[...].astype(jnp.float32)                          # (T, D)

    # ---- norm1 ----
    xn = _layernorm(x2, g1_ref[...], b1_ref[...])

    # ---- fused QKV projection: ONE (T,D)@(D,3D) bf16 matmul, f32 accumulation ----
    qkv = jnp.dot(xn.astype(bf16), wqkv_ref[...],
                  preferred_element_type=jnp.float32) + bqkv_ref[...]
    q = qkv[:, 0:D] * scale
    k = qkv[:, D:2 * D]
    v = qkv[:, 2 * D:3 * D]

    # ---- head-major (num_heads*Bt, L, hd); heads batched into single einsums ----
    # TODO(synk): replace static lane slices with reshape/pltpu.einshape when
    #             head_dim >= 128 (kept slice-based here for robust lowering at hd=8).
    def to_heads(t):
        t3 = t.reshape(Bt, L, D)                                 # leading split (L % 8 == 0)
        th = jnp.stack([t3[..., h * hd:(h + 1) * hd] for h in range(num_heads)],
                       axis=0)                                   # (H, Bt, L, hd)
        return th.reshape(num_heads * Bt, L, hd)

    qh = to_heads(q).astype(bf16)
    kh = to_heads(k).astype(bf16)
    vh = to_heads(v).astype(bf16)

    # ---- scores for all (head, batch) pairs; contraction on hd (no explicit .T) ----
    s = jnp.einsum('gld,gmd->glm', qh, kh,
                   preferred_element_type=jnp.float32)           # (G, L, L) f32
    s = s - jnp.max(s, axis=-1, keepdims=True)
    p = jnp.exp(s)
    p = p * pl.reciprocal(jnp.sum(p, axis=-1, keepdims=True), approx=True)
    oh = jnp.einsum('glm,gmd->gld', p.astype(bf16), vh,
                    preferred_element_type=jnp.float32)          # (G, L, hd)

    # ---- reassemble heads on lanes, then ONE out-projection matmul ----
    oh4 = oh.reshape(num_heads, Bt, L, hd)
    attn = jnp.concatenate([oh4[h] for h in range(num_heads)],
                           axis=-1).reshape(T, D)                # (T, D)
    attn = jnp.dot(attn.astype(bf16), wo_ref[...],
                   preferred_element_type=jnp.float32) + bo_ref[...]

    # ---- gated attention (gate from the PRE-norm residual, as in PyTorch) ----
    gate = jax.nn.sigmoid(
        jnp.dot(x2.astype(bf16), wg_ref[...],
                preferred_element_type=jnp.float32) + bg_ref[...])

    # ---- residual add (dropout = identity) ----
    res = x2 + attn * gate

    # ---- norm2 + MLP (exact-erf GELU) ----
    rn = _layernorm(res, g2_ref[...], b2_ref[...])
    h1 = jnp.dot(rn.astype(bf16), w1_ref[...],
                 preferred_element_type=jnp.float32) + bb1_ref[...]
    h1 = 0.5 * h1 * (1.0 + _erf(h1 * jnp.float32(0.7071067811865476)))
    mlp = jnp.dot(h1.astype(bf16), w2_ref[...],
                  preferred_element_type=jnp.float32) + bb2_ref[...]

    # ---- lane-dense token-major store ----
    o_ref[...] = (res + mlp).astype(o_ref.dtype)


def _pick_block_b(batch, seq_len, target_tokens=512):
    """Divisor of `batch`: token slab >= target_tokens if possible, sublane-aligned,
    and keeping >= 2 grid steps whenever batch >= 2 (v7x has 2 TensorCores)."""
    divs = [d for d in range(1, batch + 1) if batch % d == 0]
    ok = [d for d in divs if (d * seq_len) % 8 == 0 or d == batch]
    divs = ok or [batch]
    if batch >= 2:
        cand = [d for d in divs if batch // d >= 2]
        if cand:
            divs = cand
    for d in divs:
        if d * seq_len >= target_tokens:
            return d
    return divs[-1]


def _default_vmem_limit():
    # ~96 MiB on v5e/v6e (128 MiB physical), ~48 MiB on v7x (64 MiB physical).
    try:
        cap = pltpu.get_tpu_info().vmem_capacity_bytes
    except Exception:
        cap = 64 * 1024 * 1024
    return min(int(0.75 * cap), 100 * 1024 * 1024)


def prepare_params(params):
    """One-time bf16 cast of the MXU-path weights (done OUTSIDE the per-call path so
    repeated calls don't pay an extra f32->bf16 HBM pass per weight matrix)."""
    out = dict(params)
    for name in ("wqkv", "wo", "wg", "w1", "w2"):
        out[name] = params[name].astype(jnp.bfloat16)
    return out


def enhanced_transformer_block(x, params, num_heads, block_b=None):
    """x: (B, D, L) float32 -> (B, D, L) float32 (PyTorch EnhancedTransformerBlock)."""
    B, D, L = x.shape
    hidden = params["w1"].shape[1]
    if block_b is None:
        block_b = _pick_block_b(B, L)
    assert B % block_b == 0
    tokens_per_block = block_b * L

    # NCL -> token-major (B*L, D): ONE streaming XLA transpose; the kernel then sees
    # lane-dense (D-on-lanes) blocks for every load, matmul and store.
    x2d = jnp.transpose(x, (0, 2, 1)).reshape(B * L, D)

    def const_spec(shape):
        zeros = (0,) * len(shape)
        # Constant across the grid -> single-buffer to halve its VMEM footprint.
        return pl.BlockSpec(shape, lambda i, _z=zeros: _z,
                            pipeline_mode=pl.Buffered(1))

    in_specs = [
        pl.BlockSpec((tokens_per_block, D), lambda i: (i, 0)),   # token slab
        const_spec((1, D)), const_spec((1, D)),                  # norm1
        const_spec((D, 3 * D)), const_spec((1, 3 * D)),          # attn in_proj
        const_spec((D, D)), const_spec((1, D)),                  # attn out_proj
        const_spec((D, D)), const_spec((1, D)),                  # gate
        const_spec((1, D)), const_spec((1, D)),                  # norm2
        const_spec((D, hidden)), const_spec((1, hidden)),        # mlp fc1
        const_spec((hidden, D)), const_spec((1, D)),             # mlp fc2
    ]

    out2d = pl.pallas_call(
        functools.partial(transformer_block_kernel, num_heads=num_heads,
                          block_b=block_b, seq_len=L),
        out_shape=jax.ShapeDtypeStruct((B * L, D), x.dtype),
        grid=(B // block_b,),
        in_specs=in_specs,
        out_specs=pl.BlockSpec((tokens_per_block, D), lambda i: (i, 0)),
        compiler_params=pltpu.CompilerParams(
            dimension_semantics=("parallel",),
            vmem_limit_bytes=_default_vmem_limit()),
    )(x2d,
      params["g1"], params["b1"],
      params["wqkv"], params["bqkv"], params["wo"], params["bo"],
      params["wg"], params["bg"],
      params["g2"], params["b2"],
      params["w1"], params["bb1"], params["w2"], params["bb2"])

    # token-major -> NCL, again once in XLA.
    return jnp.transpose(out2d.reshape(B, L, D), (0, 2, 1))


def make_params(key, dim, num_heads, mlp_ratio=4.0):
    """Deterministic synthetic parameters, pre-transposed so y = x @ W + b."""
    hidden = int(dim * mlp_ratio)
    ks = jax.random.split(key, 8)
    s = 0.05
    return {
        "g1": jnp.ones((1, dim), jnp.float32),
        "b1": jnp.zeros((1, dim), jnp.float32),
        "wqkv": s * jax.random.normal(ks[0], (dim, 3 * dim), jnp.float32),
        "bqkv": s * jax.random.normal(ks[1], (1, 3 * dim), jnp.float32),
        "wo": s * jax.random.normal(ks[2], (dim, dim), jnp.float32),
        "bo": s * jax.random.normal(ks[3], (1, dim), jnp.float32),
        "wg": s * jax.random.normal(ks[4], (dim, dim), jnp.float32),
        "bg": s * jax.random.normal(ks[5], (1, dim), jnp.float32),
        "g2": jnp.ones((1, dim), jnp.float32),
        "b2": jnp.zeros((1, dim), jnp.float32),
        "w1": s * jax.random.normal(ks[6], (dim, hidden), jnp.float32),
        "bb1": jnp.zeros((1, hidden), jnp.float32),
        "w2": s * jax.random.normal(ks[7], (hidden, dim), jnp.float32),
        "bb2": jnp.zeros((1, dim), jnp.float32),
    }


def reference(x, params, num_heads):
    """Pure-JAX f32 reference (mirrors the PyTorch forward, dropout = identity)."""
    B, D, L = x.shape
    hd = D // num_heads
    xr = jnp.transpose(x, (0, 2, 1))             # (B, L, D)

    def ln(v, g, b, eps=1e-5):
        mu = v.mean(-1, keepdims=True)
        var = ((v - mu) ** 2).mean(-1, keepdims=True)
        return (v - mu) / jnp.sqrt(var + eps) * g + b

    xn = ln(xr, params["g1"], params["b1"])
    qkv = xn @ params["wqkv"] + params["bqkv"]
    q, k, v = jnp.split(qkv, 3, axis=-1)
    qh = q.reshape(B, L, num_heads, hd).transpose(0, 2, 1, 3) / jnp.sqrt(float(hd))
    kh = k.reshape(B, L, num_heads, hd).transpose(0, 2, 1, 3)
    vh = v.reshape(B, L, num_heads, hd).transpose(0, 2, 1, 3)
    sc = qh @ jnp.swapaxes(kh, -1, -2)
    p = jax.nn.softmax(sc, axis=-1)
    a = (p @ vh).transpose(0, 2, 1, 3).reshape(B, L, D)
    a = a @ params["wo"] + params["bo"]
    gate = jax.nn.sigmoid(xr @ params["wg"] + params["bg"])
    res = xr + a * gate
    rn = ln(res, params["g2"], params["b2"])
    h1 = rn @ params["w1"] + params["bb1"]
    h1 = 0.5 * h1 * (1.0 + jax.lax.erf(h1 / jnp.sqrt(2.0)))
    mlp = h1 @ params["w2"] + params["bb2"]
    return jnp.transpose(res + mlp, (0, 2, 1))


if __name__ == "__main__":
    B, DIM, L = 2, 32, 8
    NUM_HEADS = 4

    key = jax.random.PRNGKey(0)
    k_x, k_p = jax.random.split(key)
    x = jax.random.normal(k_x, (B, DIM, L), jnp.float32)
    params = make_params(k_p, DIM, NUM_HEADS, mlp_ratio=4.0)
    kernel_params = prepare_params(params)        # bf16 weights, cast once

    fwd = jax.jit(functools.partial(enhanced_transformer_block,
                                    num_heads=NUM_HEADS))
    out = jax.block_until_ready(fwd(x, kernel_params))

    ref = reference(x, params, NUM_HEADS)
    assert out.shape == (B, DIM, L)
    max_err = float(jnp.max(jnp.abs(out - ref)))
    # bf16 matmul path (f32 accumulation) -> relaxed tolerance vs. pure-f32 reference.
    assert jnp.allclose(out, ref, atol=2e-2, rtol=2e-2), f"max abs diff {max_err}"

    print("KERNEL_OK")
</pallas_src>

<mosaic_0001>
module attributes {stable_mosaic.version = 11 : i64} {
  func.func @transformer_block_kernel(%arg0: i32, %arg1: memref<8x32xf32, #tpu.memory_space<vmem>>, %arg2: memref<1x32xf32, #tpu.memory_space<vmem>>, %arg3: memref<1x32xf32, #tpu.memory_space<vmem>>, %arg4: memref<32x96xbf16, #tpu.memory_space<vmem>>, %arg5: memref<1x96xf32, #tpu.memory_space<vmem>>, %arg6: memref<32x32xbf16, #tpu.memory_space<vmem>>, %arg7: memref<1x32xf32, #tpu.memory_space<vmem>>, %arg8: memref<32x32xbf16, #tpu.memory_space<vmem>>, %arg9: memref<1x32xf32, #tpu.memory_space<vmem>>, %arg10: memref<1x32xf32, #tpu.memory_space<vmem>>, %arg11: memref<1x32xf32, #tpu.memory_space<vmem>>, %arg12: memref<32x128xbf16, #tpu.memory_space<vmem>>, %arg13: memref<1x128xf32, #tpu.memory_space<vmem>>, %arg14: memref<128x32xbf16, #tpu.memory_space<vmem>>, %arg15: memref<1x32xf32, #tpu.memory_space<vmem>>, %arg16: memref<8x32xf32, #tpu.memory_space<vmem>>) attributes {dimension_semantics = [#tpu.dimension_semantics<parallel>], iteration_bounds = array<i64: 2>, scalar_prefetch = 0 : i64, scratch_operands = 0 : i64, tpu.core_type = #tpu.core_type<tc>, window_params = [{transform_indices = @transform_0, window_bounds = array<i64: 8, 32>}, {pipeline_mode = #tpu.pipeline_mode<synchronous>, transform_indices = @transform_1, window_bounds = array<i64: 1, 32>}, {pipeline_mode = #tpu.pipeline_mode<synchronous>, transform_indices = @transform_2, window_bounds = array<i64: 1, 32>}, {pipeline_mode = #tpu.pipeline_mode<synchronous>, transform_indices = @transform_3, window_bounds = array<i64: 32, 96>}, {pipeline_mode = #tpu.pipeline_mode<synchronous>, transform_indices = @transform_4, window_bounds = array<i64: 1, 96>}, {pipeline_mode = #tpu.pipeline_mode<synchronous>, transform_indices = @transform_5, window_bounds = array<i64: 32, 32>}, {pipeline_mode = #tpu.pipeline_mode<synchronous>, transform_indices = @transform_6, window_bounds = array<i64: 1, 32>}, {pipeline_mode = #tpu.pipeline_mode<synchronous>, transform_indices = @transform_7, window_bounds = array<i64: 32, 32>}, {pipeline_mode = #tpu.pipeline_mode<synchronous>, transform_indices = @transform_8, window_bounds = array<i64: 1, 32>}, {pipeline_mode = #tpu.pipeline_mode<synchronous>, transform_indices = @transform_9, window_bounds = array<i64: 1, 32>}, {pipeline_mode = #tpu.pipeline_mode<synchronous>, transform_indices = @transform_10, window_bounds = array<i64: 1, 32>}, {pipeline_mode = #tpu.pipeline_mode<synchronous>, transform_indices = @transform_11, window_bounds = array<i64: 32, 128>}, {pipeline_mode = #tpu.pipeline_mode<synchronous>, transform_indices = @transform_12, window_bounds = array<i64: 1, 128>}, {pipeline_mode = #tpu.pipeline_mode<synchronous>, transform_indices = @transform_13, window_bounds = array<i64: 128, 32>}, {pipeline_mode = #tpu.pipeline_mode<synchronous>, transform_indices = @transform_14, window_bounds = array<i64: 1, 32>}, {transform_indices = @transform_15, window_bounds = array<i64: 8, 32>}]} {
    %c0 = arith.constant 0 : index
    %c0_0 = arith.constant 0 : index
    %0 = vector.load %arg1[%c0, %c0_0] : memref<8x32xf32, #tpu.memory_space<vmem>>, vector<8x32xf32>
    %c0_1 = arith.constant 0 : index
    %c0_2 = arith.constant 0 : index
    %1 = vector.load %arg2[%c0_1, %c0_2] : memref<1x32xf32, #tpu.memory_space<vmem>>, vector<1x32xf32>
    %c0_3 = arith.constant 0 : index
    %c0_4 = arith.constant 0 : index
    %2 = vector.load %arg3[%c0_3, %c0_4] : memref<1x32xf32, #tpu.memory_space<vmem>>, vector<1x32xf32>
    %cst = arith.constant dense<0.000000e+00> : vector<8xf32>
    %3 = vector.multi_reduction <add>, %0, %cst [1] : vector<8x32xf32> to vector<8xf32>
    %4 = vector.shape_cast %3 : vector<8xf32> to vector<8x1xf32>
    %cst_5 = arith.constant 3.200000e+01 : f32
    %5 = vector.broadcast %cst_5 : f32 to vector<8x1xf32>
    %6 = arith.divf %4, %5 : vector<8x1xf32>
    %7 = vector.broadcast %6 : vector<8x1xf32> to vector<8x32xf32>
    %8 = arith.subf %0, %7 : vector<8x32xf32>
    %9 = arith.mulf %8, %8 : vector<8x32xf32>
    %cst_6 = arith.constant dense<0.000000e+00> : vector<8xf32>
    %10 = vector.multi_reduction <add>, %9, %cst_6 [1] : vector<8x32xf32> to vector<8xf32>
    %11 = vector.shape_cast %10 : vector<8xf32> to vector<8x1xf32>
    %cst_7 = arith.constant 3.200000e+01 : f32
    %12 = vector.broadcast %cst_7 : f32 to vector<8x1xf32>
    %13 = arith.divf %11, %12 : vector<8x1xf32>
    %14 = vector.broadcast %6 : vector<8x1xf32> to vector<8x32xf32>
    %15 = arith.subf %0, %14 : vector<8x32xf32>
    %cst_8 = arith.constant 9.99999974E-6 : f32
    %16 = vector.broadcast %cst_8 : f32 to vector<8x1xf32>
    %17 = arith.addf %13, %16 : vector<8x1xf32>
    %18 = math.rsqrt %17 : vector<8x1xf32>
    %19 = vector.broadcast %18 : vector<8x1xf32> to vector<8x32xf32>
    %20 = arith.mulf %15, %19 : vector<8x32xf32>
    %21 = vector.broadcast %1 : vector<1x32xf32> to vector<8x32xf32>
    %22 = arith.mulf %20, %21 : vector<8x32xf32>
    %23 = vector.broadcast %2 : vector<1x32xf32> to vector<8x32xf32>
    %24 = arith.addf %22, %23 : vector<8x32xf32>
    %25 = arith.truncf %24 : vector<8x32xf32> to vector<8x32xbf16>
    %c0_9 = arith.constant 0 : index
    %c0_10 = arith.constant 0 : index
    %26 = vector.load %arg4[%c0_9, %c0_10] : memref<32x96xbf16, #tpu.memory_space<vmem>>, vector<32x96xbf16>
    %cst_11 = arith.constant dense<0.000000e+00> : vector<8x96xf32>
    %27 = tpu.matmul %25, %26, %cst_11 {dimension_numbers = #tpu.dot_dimension_numbers<[1], [0], [0], [1], [0, 0, 1, 1], [], []>} : vector<8x32xbf16>, vector<32x96xbf16>, vector<8x96xf32> -> vector<8x96xf32>
    %c0_12 = arith.constant 0 : index
    %c0_13 = arith.constant 0 : index
    %28 = vector.load %arg5[%c0_12, %c0_13] : memref<1x96xf32, #tpu.memory_space<vmem>>, vector<1x96xf32>
    %29 = vector.broadcast %28 : vector<1x96xf32> to vector<8x96xf32>
    %30 = arith.addf %27, %29 : vector<8x96xf32>
    %31 = vector.extract_strided_slice %30 {offsets = [0, 0], sizes = [8, 32], strides = [1, 1]} : vector<8x96xf32> to vector<8x32xf32>
    %cst_14 = arith.constant 0.353553385 : f32
    %32 = vector.broadcast %cst_14 : f32 to vector<8x32xf32>
    %33 = arith.mulf %31, %32 : vector<8x32xf32>
    %34 = vector.extract_strided_slice %30 {offsets = [0, 32], sizes = [8, 32], strides = [1, 1]} : vector<8x96xf32> to vector<8x32xf32>
    %35 = vector.extract_strided_slice %30 {offsets = [0, 64], sizes = [8, 32], strides = [1, 1]} : vector<8x96xf32> to vector<8x32xf32>
    %36 = vector.shape_cast %33 : vector<8x32xf32> to vector<1x8x32xf32>
    %37 = vector.extract_strided_slice %36 {offsets = [0, 0, 0], sizes = [1, 8, 8], strides = [1, 1, 1]} : vector<1x8x32xf32> to vector<1x8x8xf32>
    %38 = vector.extract_strided_slice %36 {offsets = [0, 0, 8], sizes = [1, 8, 8], strides = [1, 1, 1]} : vector<1x8x32xf32> to vector<1x8x8xf32>
    %39 = vector.extract_strided_slice %36 {offsets = [0, 0, 16], sizes = [1, 8, 8], strides = [1, 1, 1]} : vector<1x8x32xf32> to vector<1x8x8xf32>
    %40 = vector.extract_strided_slice %36 {offsets = [0, 0, 24], sizes = [1, 8, 8], strides = [1, 1, 1]} : vector<1x8x32xf32> to vector<1x8x8xf32>
    %41 = vector.shape_cast %37 : vector<1x8x8xf32> to vector<1x1x8x8xf32>
    %42 = vector.shape_cast %38 : vector<1x8x8xf32> to vector<1x1x8x8xf32>
    %43 = vector.shape_cast %39 : vector<1x8x8xf32> to vector<1x1x8x8xf32>
    %44 = vector.shape_cast %40 : vector<1x8x8xf32> to vector<1x1x8x8xf32>
    %45 = tpu.concatenate %41, %42, %43, %44 in 0 : vector<1x1x8x8xf32>, vector<1x1x8x8xf32>, vector<1x1x8x8xf32>, vector<1x1x8x8xf32> -> vector<4x1x8x8xf32>
    %46 = vector.shape_cast %45 : vector<4x1x8x8xf32> to vector<4x8x8xf32>
    %47 = arith.truncf %46 : vector<4x8x8xf32> to vector<4x8x8xbf16>
    %48 = vector.shape_cast %34 : vector<8x32xf32> to vector<1x8x32xf32>
    %49 = vector.extract_strided_slice %48 {offsets = [0, 0, 0], sizes = [1, 8, 8], strides = [1, 1, 1]} : vector<1x8x32xf32> to vector<1x8x8xf32>
    %50 = vector.extract_strided_slice %48 {offsets = [0, 0, 8], sizes = [1, 8, 8], strides = [1, 1, 1]} : vector<1x8x32xf32> to vector<1x8x8xf32>
    %51 = vector.extract_strided_slice %48 {offsets = [0, 0, 16], sizes = [1, 8, 8], strides = [1, 1, 1]} : vector<1x8x32xf32> to vector<1x8x8xf32>
    %52 = vector.extract_strided_slice %48 {offsets = [0, 0, 24], sizes = [1, 8, 8], strides = [1, 1, 1]} : vector<1x8x32xf32> to vector<1x8x8xf32>
    %53 = vector.shape_cast %49 : vector<1x8x8xf32> to vector<1x1x8x8xf32>
    %54 = vector.shape_cast %50 : vector<1x8x8xf32> to vector<1x1x8x8xf32>
    %55 = vector.shape_cast %51 : vector<1x8x8xf32> to vector<1x1x8x8xf32>
    %56 = vector.shape_cast %52 : vector<1x8x8xf32> to vector<1x1x8x8xf32>
    %57 = tpu.concatenate %53, %54, %55, %56 in 0 : vector<1x1x8x8xf32>, vector<1x1x8x8xf32>, vector<1x1x8x8xf32>, vector<1x1x8x8xf32> -> vector<4x1x8x8xf32>
    %58 = vector.shape_cast %57 : vector<4x1x8x8xf32> to vector<4x8x8xf32>
    %59 = arith.truncf %58 : vector<4x8x8xf32> to vector<4x8x8xbf16>
    %60 = vector.shape_cast %35 : vector<8x32xf32> to vector<1x8x32xf32>
    %61 = vector.extract_strided_slice %60 {offsets = [0, 0, 0], sizes = [1, 8, 8], strides = [1, 1, 1]} : vector<1x8x32xf32> to vector<1x8x8xf32>
    %62 = vector.extract_strided_slice %60 {offsets = [0, 0, 8], sizes = [1, 8, 8], strides = [1, 1, 1]} : vector<1x8x32xf32> to vector<1x8x8xf32>
    %63 = vector.extract_strided_slice %60 {offsets = [0, 0, 16], sizes = [1, 8, 8], strides = [1, 1, 1]} : vector<1x8x32xf32> to vector<1x8x8xf32>
    %64 = vector.extract_strided_slice %60 {offsets = [0, 0, 24], sizes = [1, 8, 8], strides = [1, 1, 1]} : vector<1x8x32xf32> to vector<1x8x8xf32>
    %65 = vector.shape_cast %61 : vector<1x8x8xf32> to vector<1x1x8x8xf32>
    %66 = vector.shape_cast %62 : vector<1x8x8xf32> to vector<1x1x8x8xf32>
    %67 = vector.shape_cast %63 : vector<1x8x8xf32> to vector<1x1x8x8xf32>
    %68 = vector.shape_cast %64 : vector<1x8x8xf32> to vector<1x1x8x8xf32>
    %69 = tpu.concatenate %65, %66, %67, %68 in 0 : vector<1x1x8x8xf32>, vector<1x1x8x8xf32>, vector<1x1x8x8xf32>, vector<1x1x8x8xf32> -> vector<4x1x8x8xf32>
    %70 = vector.shape_cast %69 : vector<4x1x8x8xf32> to vector<4x8x8xf32>
    %71 = arith.truncf %70 : vector<4x8x8xf32> to vector<4x8x8xbf16>
    "tpu.trace_start"() <{level = 10 : i32, message = "gld,gmd->glm"}> : () -> ()
    %cst_15 = arith.constant dense<0.000000e+00> : vector<4x8x8xf32>
    %72 = tpu.matmul %47, %59, %cst_15 {dimension_numbers = #tpu.dot_dimension_numbers<[2], [2], [1], [1], [0, 0, 0, 1, 1, 1], [0], [0]>} : vector<4x8x8xbf16>, vector<4x8x8xbf16>, vector<4x8x8xf32> -> vector<4x8x8xf32>
    "tpu.trace_stop"() : () -> ()
    %cst_16 = arith.constant dense<0xFF800000> : vector<4x8xf32>
    %73 = vector.multi_reduction <maximumf>, %72, %cst_16 [2] : vector<4x8x8xf32> to vector<4x8xf32>
    %74 = vector.shape_cast %73 : vector<4x8xf32> to vector<4x8x1xf32>
    %75 = vector.broadcast %74 : vector<4x8x1xf32> to vector<4x8x8xf32>
    %76 = arith.subf %72, %75 : vector<4x8x8xf32>
    %77 = math.exp %76 : vector<4x8x8xf32>
    %cst_17 = arith.constant dense<0.000000e+00> : vector<4x8xf32>
    %78 = vector.multi_reduction <add>, %77, %cst_17 [2] : vector<4x8x8xf32> to vector<4x8xf32>
    %79 = vector.shape_cast %78 : vector<4x8xf32> to vector<4x8x1xf32>
    %80 = tpu.reciprocal %79 {approx = true} : vector<4x8x1xf32> -> vector<4x8x1xf32>
    %81 = vector.broadcast %80 : vector<4x8x1xf32> to vector<4x8x8xf32>
    %82 = arith.mulf %77, %81 : vector<4x8x8xf32>
    %83 = arith.truncf %82 : vector<4x8x8xf32> to vector<4x8x8xbf16>
    "tpu.trace_start"() <{level = 10 : i32, message = "glm,gmd->gld"}> : () -> ()
    %cst_18 = arith.constant dense<0.000000e+00> : vector<4x8x8xf32>
    %84 = tpu.matmul %83, %71, %cst_18 {dimension_numbers = #tpu.dot_dimension_numbers<[2], [1], [1], [2], [0, 0, 0, 1, 1, 2], [0], [0]>} : vector<4x8x8xbf16>, vector<4x8x8xbf16>, vector<4x8x8xf32> -> vector<4x8x8xf32>
    "tpu.trace_stop"() : () -> ()
    %85 = vector.shape_cast %84 : vector<4x8x8xf32> to vector<4x1x8x8xf32>
    %86 = vector.extract_strided_slice %85 {offsets = [0, 0, 0, 0], sizes = [1, 1, 8, 8], strides = [1, 1, 1, 1]} : vector<4x1x8x8xf32> to vector<1x1x8x8xf32>
    %87 = vector.shape_cast %86 : vector<1x1x8x8xf32> to vector<1x8x8xf32>
    %88 = vector.extract_strided_slice %85 {offsets = [1, 0, 0, 0], sizes = [1, 1, 8, 8], strides = [1, 1, 1, 1]} : vector<4x1x8x8xf32> to vector<1x1x8x8xf32>
    %89 = vector.shape_cast %88 : vector<1x1x8x8xf32> to vector<1x8x8xf32>
    %90 = vector.extract_strided_slice %85 {offsets = [2, 0, 0, 0], sizes = [1, 1, 8, 8], strides = [1, 1, 1, 1]} : vector<4x1x8x8xf32> to vector<1x1x8x8xf32>
    %91 = vector.shape_cast %90 : vector<1x1x8x8xf32> to vector<1x8x8xf32>
    %92 = vector.extract_strided_slice %85 {offsets = [3, 0, 0, 0], sizes = [1, 1, 8, 8], strides = [1, 1, 1, 1]} : vector<4x1x8x8xf32> to vector<1x1x8x8xf32>
    %93 = vector.shape_cast %92 : vector<1x1x8x8xf32> to vector<1x8x8xf32>
    %94 = tpu.concatenate %87, %89, %91, %93 in 2 : vector<1x8x8xf32>, vector<1x8x8xf32>, vector<1x8x8xf32>, vector<1x8x8xf32> -> vector<1x8x32xf32>
    %95 = vector.shape_cast %94 : vector<1x8x32xf32> to vector<8x32xf32>
    %96 = arith.truncf %95 : vector<8x32xf32> to vector<8x32xbf16>
    %c0_19 = arith.constant 0 : index
    %c0_20 = arith.constant 0 : index
    %97 = vector.load %arg6[%c0_19, %c0_20] : memref<32x32xbf16, #tpu.memory_space<vmem>>, vector<32x32xbf16>
    %cst_21 = arith.constant dense<0.000000e+00> : vector<8x32xf32>
    %98 = tpu.matmul %96, %97, %cst_21 {dimension_numbers = #tpu.dot_dimension_numbers<[1], [0], [0], [1], [0, 0, 1, 1], [], []>} : vector<8x32xbf16>, vector<32x32xbf16>, vector<8x32xf32> -> vector<8x32xf32>
    %c0_22 = arith.constant 0 : index
    %c0_23 = arith.constant 0 : index
    %99 = vector.load %arg7[%c0_22, %c0_23] : memref<1x32xf32, #tpu.memory_space<vmem>>, vector<1x32xf32>
    %100 = vector.broadcast %99 : vector<1x32xf32> to vector<8x32xf32>
    %101 = arith.addf %98, %100 : vector<8x32xf32>
    %102 = arith.truncf %0 : vector<8x32xf32> to vector<8x32xbf16>
    %c0_24 = arith.constant 0 : index
    %c0_25 = arith.constant 0 : index
    %103 = vector.load %arg8[%c0_24, %c0_25] : memref<32x32xbf16, #tpu.memory_space<vmem>>, vector<32x32xbf16>
    %cst_26 = arith.constant dense<0.000000e+00> : vector<8x32xf32>
    %104 = tpu.matmul %102, %103, %cst_26 {dimension_numbers = #tpu.dot_dimension_numbers<[1], [0], [0], [1], [0, 0, 1, 1], [], []>} : vector<8x32xbf16>, vector<32x32xbf16>, vector<8x32xf32> -> vector<8x32xf32>
    %c0_27 = arith.constant 0 : index
    %c0_28 = arith.constant 0 : index
    %105 = vector.load %arg9[%c0_27, %c0_28] : memref<1x32xf32, #tpu.memory_space<vmem>>, vector<1x32xf32>
    %106 = vector.broadcast %105 : vector<1x32xf32> to vector<8x32xf32>
    %107 = arith.addf %104, %106 : vector<8x32xf32>
    %108 = arith.negf %107 : vector<8x32xf32>
    %109 = math.exp %108 : vector<8x32xf32>
    %cst_29 = arith.constant 1.000000e+00 : f32
    %110 = vector.broadcast %cst_29 : f32 to vector<8x32xf32>
    %111 = arith.addf %110, %109 : vector<8x32xf32>
    %112 = arith.divf %110, %111 : vector<8x32xf32>
    %113 = arith.mulf %101, %112 : vector<8x32xf32>
    %114 = arith.addf %0, %113 : vector<8x32xf32>
    %c0_30 = arith.constant 0 : index
    %c0_31 = arith.constant 0 : index
    %115 = vector.load %arg10[%c0_30, %c0_31] : memref<1x32xf32, #tpu.memory_space<vmem>>, vector<1x32xf32>
    %c0_32 = arith.constant 0 : index
    %c0_33 = arith.constant 0 : index
    %116 = vector.load %arg11[%c0_32, %c0_33] : memref<1x32xf32, #tpu.memory_space<vmem>>, vector<1x32xf32>
    %cst_34 = arith.constant dense<0.000000e+00> : vector<8xf32>
    %117 = vector.multi_reduction <add>, %114, %cst_34 [1] : vector<8x32xf32> to vector<8xf32>
    %118 = vector.shape_cast %117 : vector<8xf32> to vector<8x1xf32>
    %cst_35 = arith.constant 3.200000e+01 : f32
    %119 = vector.broadcast %cst_35 : f32 to vector<8x1xf32>
    %120 = arith.divf %118, %119 : vector<8x1xf32>
    %121 = vector.broadcast %120 : vector<8x1xf32> to vector<8x32xf32>
    %122 = arith.subf %114, %121 : vector<8x32xf32>
    %123 = arith.mulf %122, %122 : vector<8x32xf32>
    %cst_36 = arith.constant dense<0.000000e+00> : vector<8xf32>
    %124 = vector.multi_reduction <add>, %123, %cst_36 [1] : vector<8x32xf32> to vector<8xf32>
    %125 = vector.shape_cast %124 : vector<8xf32> to vector<8x1xf32>
    %cst_37 = arith.constant 3.200000e+01 : f32
    %126 = vector.broadcast %cst_37 : f32 to vector<8x1xf32>
    %127 = arith.divf %125, %126 : vector<8x1xf32>
    %128 = vector.broadcast %120 : vector<8x1xf32> to vector<8x32xf32>
    %129 = arith.subf %114, %128 : vector<8x32xf32>
    %cst_38 = arith.constant 9.99999974E-6 : f32
    %130 = vector.broadcast %cst_38 : f32 to vector<8x1xf32>
    %131 = arith.addf %127, %130 : vector<8x1xf32>
    %132 = math.rsqrt %131 : vector<8x1xf32>
    %133 = vector.broadcast %132 : vector<8x1xf32> to vector<8x32xf32>
    %134 = arith.mulf %129, %133 : vector<8x32xf32>
    %135 = vector.broadcast %115 : vector<1x32xf32> to vector<8x32xf32>
    %136 = arith.mulf %134, %135 : vector<8x32xf32>
    %137 = vector.broadcast %116 : vector<1x32xf32> to vector<8x32xf32>
    %138 = arith.addf %136, %137 : vector<8x32xf32>
    %139 = arith.truncf %138 : vector<8x32xf32> to vector<8x32xbf16>
    %c0_39 = arith.constant 0 : index
    %c0_40 = arith.constant 0 : index
    %140 = vector.load %arg12[%c0_39, %c0_40] : memref<32x128xbf16, #tpu.memory_space<vmem>>, vector<32x128xbf16>
    %cst_41 = arith.constant dense<0.000000e+00> : vector<8x128xf32>
    %141 = tpu.matmul %139, %140, %cst_41 {dimension_numbers = #tpu.dot_dimension_numbers<[1], [0], [0], [1], [0, 0, 1, 1], [], []>} : vector<8x32xbf16>, vector<32x128xbf16>, vector<8x128xf32> -> vector<8x128xf32>
    %c0_42 = arith.constant 0 : index
    %c0_43 = arith.constant 0 : index
    %142 = vector.load %arg13[%c0_42, %c0_43] : memref<1x128xf32, #tpu.memory_space<vmem>>, vector<1x128xf32>
    %143 = vector.broadcast %142 : vector<1x128xf32> to vector<8x128xf32>
    %144 = arith.addf %141, %143 : vector<8x128xf32>
    %cst_44 = arith.constant 5.000000e-01 : f32
    %145 = vector.broadcast %cst_44 : f32 to vector<8x128xf32>
    %146 = arith.mulf %145, %144 : vector<8x128xf32>
    %cst_45 = arith.constant 0.707106769 : f32
    %147 = vector.broadcast %cst_45 : f32 to vector<8x128xf32>
    %148 = arith.mulf %144, %147 : vector<8x128xf32>
    %149 = math.absf %148 : vector<8x128xf32>
    %cst_46 = arith.constant 0.327591091 : f32
    %150 = vector.broadcast %cst_46 : f32 to vector<8x128xf32>
    %151 = arith.mulf %150, %149 : vector<8x128xf32>
    %cst_47 = arith.constant 1.000000e+00 : f32
    %152 = vector.broadcast %cst_47 : f32 to vector<8x128xf32>
    %153 = arith.addf %152, %151 : vector<8x128xf32>
    %cst_48 = arith.constant 1.000000e+00 : f32
    %154 = vector.broadcast %cst_48 : f32 to vector<8x128xf32>
    %155 = arith.divf %154, %153 : vector<8x128xf32>
    %cst_49 = arith.constant 1.06140542 : f32
    %156 = vector.broadcast %cst_49 : f32 to vector<8x128xf32>
    %157 = arith.mulf %156, %155 : vector<8x128xf32>
    %cst_50 = arith.constant -1.45315206 : f32
    %158 = vector.broadcast %cst_50 : f32 to vector<8x128xf32>
    %159 = arith.addf %157, %158 : vector<8x128xf32>
    %160 = arith.mulf %159, %155 : vector<8x128xf32>
    %cst_51 = arith.constant 1.42141378 : f32
    %161 = vector.broadcast %cst_51 : f32 to vector<8x128xf32>
    %162 = arith.addf %160, %161 : vector<8x128xf32>
    %163 = arith.mulf %162, %155 : vector<8x128xf32>
    %cst_52 = arith.constant -0.284496725 : f32
    %164 = vector.broadcast %cst_52 : f32 to vector<8x128xf32>
    %165 = arith.addf %163, %164 : vector<8x128xf32>
    %166 = arith.mulf %165, %155 : vector<8x128xf32>
    %cst_53 = arith.constant 0.254829586 : f32
    %167 = vector.broadcast %cst_53 : f32 to vector<8x128xf32>
    %168 = arith.addf %166, %167 : vector<8x128xf32>
    %169 = arith.mulf %168, %155 : vector<8x128xf32>
    %cst_54 = arith.constant 0.000000e+00 : f32
    %170 = vector.broadcast %cst_54 : f32 to vector<8x128xf32>
    %171 = arith.subf %170, %149 : vector<8x128xf32>
    %172 = arith.mulf %171, %149 : vector<8x128xf32>
    %173 = math.exp %172 : vector<8x128xf32>
    %174 = arith.mulf %169, %173 : vector<8x128xf32>
    %cst_55 = arith.constant 1.000000e+00 : f32
    %175 = vector.broadcast %cst_55 : f32 to vector<8x128xf32>
    %176 = arith.subf %175, %174 : vector<8x128xf32>
    %cst_56 = arith.constant 0.000000e+00 : f32
    %177 = vector.broadcast %cst_56 : f32 to vector<8x128xf32>
    %178 = arith.cmpf oge, %148, %177 : vector<8x128xf32>
    %cst_57 = arith.constant 0.000000e+00 : f32
    %179 = vector.broadcast %cst_57 : f32 to vector<8x128xf32>
    %180 = arith.subf %179, %176 : vector<8x128xf32>
    %181 = arith.select %178, %176, %180 : vector<8x128xi1>, vector<8x128xf32>
    %cst_58 = arith.constant 1.000000e+00 : f32
    %182 = vector.broadcast %cst_58 : f32 to vector<8x128xf32>
    %183 = arith.addf %182, %181 : vector<8x128xf32>
    %184 = arith.mulf %146, %183 : vector<8x128xf32>
    %185 = arith.truncf %184 : vector<8x128xf32> to vector<8x128xbf16>
    %c0_59 = arith.constant 0 : index
    %c0_60 = arith.constant 0 : index
    %186 = vector.load %arg14[%c0_59, %c0_60] : memref<128x32xbf16, #tpu.memory_space<vmem>>, vector<128x32xbf16>
    %cst_61 = arith.constant dense<0.000000e+00> : vector<8x32xf32>
    %187 = tpu.matmul %185, %186, %cst_61 {dimension_numbers = #tpu.dot_dimension_numbers<[1], [0], [0], [1], [0, 0, 1, 1], [], []>} : vector<8x128xbf16>, vector<128x32xbf16>, vector<8x32xf32> -> vector<8x32xf32>
    %c0_62 = arith.constant 0 : index
    %c0_63 = arith.constant 0 : index
    %188 = vector.load %arg15[%c0_62, %c0_63] : memref<1x32xf32, #tpu.memory_space<vmem>>, vector<1x32xf32>
    %189 = vector.broadcast %188 : vector<1x32xf32> to vector<8x32xf32>
    %190 = arith.addf %187, %189 : vector<8x32xf32>
    %191 = arith.addf %114, %190 : vector<8x32xf32>
    %c0_64 = arith.constant 0 : index
    %c0_65 = arith.constant 0 : index
    %192 = vector.load %arg16[%c0_64, %c0_65] : memref<8x32xf32, #tpu.memory_space<vmem>>, vector<8x32xf32>
    tpu.vector_store %arg16[%c0_64, %c0_65], %191 {strides = array<i32>} : memref<8x32xf32, #tpu.memory_space<vmem>>, vector<8x32xf32>,
    return
  }
  func.func @transform_0(%arg0: i32) -> (i32, i32) {
    %c0_i32 = arith.constant 0 : i32
    %c0_i32_0 = arith.constant 0 : i32
    return %arg0, %c0_i32 : i32, i32
  }
  func.func @transform_1(%arg0: i32) -> (i32, i32) {
    %c0_i32 = arith.constant 0 : i32
    %c0_i32_0 = arith.constant 0 : i32
    %c0_i32_1 = arith.constant 0 : i32
    return %c0_i32, %c0_i32_0 : i32, i32
  }
  func.func @transform_2(%arg0: i32) -> (i32, i32) {
    %c0_i32 = arith.constant 0 : i32
    %c0_i32_0 = arith.constant 0 : i32
    %c0_i32_1 = arith.constant 0 : i32
    return %c0_i32, %c0_i32_0 : i32, i32
  }
  func.func @transform_3(%arg0: i32) -> (i32, i32) {
    %c0_i32 = arith.constant 0 : i32
    %c0_i32_0 = arith.constant 0 : i32
    %c0_i32_1 = arith.constant 0 : i32
    return %c0_i32, %c0_i32_0 : i32, i32
  }
  func.func @transform_4(%arg0: i32) -> (i32, i32) {
    %c0_i32 = arith.constant 0 : i32
    %c0_i32_0 = arith.constant 0 : i32
    %c0_i32_1 = arith.constant 0 : i32
    return %c0_i32, %c0_i32_0 : i32, i32
  }
  func.func @transform_5(%arg0: i32) -> (i32, i32) {
    %c0_i32 = arith.constant 0 : i32
    %c0_i32_0 = arith.constant 0 : i32
    %c0_i32_1 = arith.constant 0 : i32
    return %c0_i32, %c0_i32_0 : i32, i32
  }
  func.func @transform_6(%arg0: i32) -> (i32, i32) {
    %c0_i32 = arith.constant 0 : i32
    %c0_i32_0 = arith.constant 0 : i32
    %c0_i32_1 = arith.constant 0 : i32
    return %c0_i32, %c0_i32_0 : i32, i32
  }
  func.func @transform_7(%arg0: i32) -> (i32, i32) {
    %c0_i32 = arith.constant 0 : i32
    %c0_i32_0 = arith.constant 0 : i32
    %c0_i32_1 = arith.constant 0 : i32
    return %c0_i32, %c0_i32_0 : i32, i32
  }
  func.func @transform_8(%arg0: i32) -> (i32, i32) {
    %c0_i32 = arith.constant 0 : i32
    %c0_i32_0 = arith.constant 0 : i32
    %c0_i32_1 = arith.constant 0 : i32
    return %c0_i32, %c0_i32_0 : i32, i32
  }
  func.func @transform_9(%arg0: i32) -> (i32, i32) {
    %c0_i32 = arith.constant 0 : i32
    %c0_i32_0 = arith.constant 0 : i32
    %c0_i32_1 = arith.constant 0 : i32
    return %c0_i32, %c0_i32_0 : i32, i32
  }
  func.func @transform_10(%arg0: i32) -> (i32, i32) {
    %c0_i32 = arith.constant 0 : i32
    %c0_i32_0 = arith.constant 0 : i32
    %c0_i32_1 = arith.constant 0 : i32
    return %c0_i32, %c0_i32_0 : i32, i32
  }
  func.func @transform_11(%arg0: i32) -> (i32, i32) {
    %c0_i32 = arith.constant 0 : i32
    %c0_i32_0 = arith.constant 0 : i32
    %c0_i32_1 = arith.constant 0 : i32
    return %c0_i32, %c0_i32_0 : i32, i32
  }
  func.func @transform_12(%arg0: i32) -> (i32, i32) {
    %c0_i32 = arith.constant 0 : i32
    %c0_i32_0 = arith.constant 0 : i32
    %c0_i32_1 = arith.constant 0 : i32
    return %c0_i32, %c0_i32_0 : i32, i32
  }
  func.func @transform_13(%arg0: i32) -> (i32, i32) {
    %c0_i32 = arith.constant 0 : i32
    %c0_i32_0 = arith.constant 0 : i32
    %c0_i32_1 = arith.constant 0 : i32
    return %c0_i32, %c0_i32_0 : i32, i32
  }
  func.func @transform_14(%arg0: i32) -> (i32, i32) {
    %c0_i32 = arith.constant 0 : i32
    %c0_i32_0 = arith.constant 0 : i32
    %c0_i32_1 = arith.constant 0 : i32
    return %c0_i32, %c0_i32_0 : i32, i32
  }
  func.func @transform_15(%arg0: i32) -> (i32, i32) {
    %c0_i32 = arith.constant 0 : i32
    %c0_i32_0 = arith.constant 0 : i32
    return %arg0, %c0_i32 : i32, i32
  }
}

</mosaic_0001>

<llo_original>
// kernel: enhanced_transformer_block.1
$region0: #{enhanced_transformer_block.1}
  #allocation0 [shape = 'u32[]', space=smem, size = 0x4, offset = 0x4, fixed_abs, tag = 'smem constant byte address 0x4 - core index']
  #allocation1 [shape = 'u32[144,128]{1,0:T(1,128)}', space=vmem, size = 0x12000, scoped, tag = 'internal scratch']
  %s0 = inlined_call_operand.vmem [shape: f32[16,32], index: 0, kind: input, shape index: {}]
  %s1 = inlined_call_operand.vmem [shape: f32[1,32], index: 1, kind: input, shape index: {}]
  %s2 = inlined_call_operand.vmem [shape: f32[1,32], index: 2, kind: input, shape index: {}]
  %s3 = inlined_call_operand.vmem [shape: bf16[32,96], index: 3, kind: input, shape index: {}]
  %s4 = inlined_call_operand.vmem [shape: f32[1,96], index: 4, kind: input, shape index: {}]
  %s5 = inlined_call_operand.vmem [shape: bf16[32,32], index: 5, kind: input, shape index: {}]
  %s6 = inlined_call_operand.vmem [shape: f32[1,32], index: 6, kind: input, shape index: {}]
  %s7 = inlined_call_operand.vmem [shape: bf16[32,32], index: 7, kind: input, shape index: {}]
  %s8 = inlined_call_operand.vmem [shape: f32[1,32], index: 8, kind: input, shape index: {}]
  %s9 = inlined_call_operand.vmem [shape: f32[1,32], index: 9, kind: input, shape index: {}]
  %s10 = inlined_call_operand.vmem [shape: f32[1,32], index: 10, kind: input, shape index: {}]
  %s11 = inlined_call_operand.vmem [shape: bf16[32,128], index: 11, kind: input, shape index: {}]
  %s12 = inlined_call_operand.vmem [shape: f32[1,128], index: 12, kind: input, shape index: {}]
  %s13 = inlined_call_operand.vmem [shape: bf16[128,32], index: 13, kind: input, shape index: {}]
  %s14 = inlined_call_operand.vmem [shape: f32[1,32], index: 14, kind: input, shape index: {}]
  %s15 = inlined_call_operand.hbm [shape: f32[16,32], index: 15, kind: output, shape index: {}]
  %s16 = sld [smem:[#allocation0]]
  $region93: #{enhanced_transformer_block.1} parent=0
    _
  %s18 = ssub.s32 1, %s16
  %s19 = scalar_select 0, %s18, %s16
  $region1: #{enhanced_transformer_block.1} parent=0
    #allocation2 [shape = 'u8[8192]{0}', space=vmem, size = 0x2000, scoped, tag = 'output window, operand 0']
    #allocation3 [shape = 's32[2]{0}', space=sflag, size = 0x8, scoped, tag = 'scoped memory for enhanced_transformer_block.1']
    %20 = vsyncpa [#allocation3], 0
    %s21 = scalar_lea.sflag [#allocation3], 1
    %22 = vsyncpa %s21, 0
    loop: start=0, step=1, limit=4
    $region2: #{enhanced_transformer_block.1} parent=1 // loop_pre_header
      _
    $region3: #{enhanced_transformer_block.1} parent=1 // loop_header
      %s24 = sphi 0, %s28
      %p25 = scmp.ge.s32.totalorder %s24, 4
      %s34 = sphi 0, %s36
      %s37 = sphi 0, %s34
      %s38 = sphi 0, %s37
      %s54 = sphi 0, %s38
      %s58 = sphi 0, %s58
      %s60 = sphi 0, %s58
      %s61 = sphi 0, %s60
      %s75 = sphi 0, %s61
      %s79 = sphi 0, %s79
      %s81 = sphi 0, %s79
      %s82 = sphi 0, %s81
      %s96 = sphi 0, %s82
      %s100 = sphi 0, %s100
      %s102 = sphi 0, %s100
      %s103 = sphi 0, %s102
      %s117 = sphi 0, %s103
      %s121 = sphi 0, %s121
      %s123 = sphi 0, %s121
      %s124 = sphi 0, %s123
      %s138 = sphi 0, %s124
      %s142 = sphi 0, %s142
      %s144 = sphi 0, %s142
      %s145 = sphi 0, %s144
      %s159 = sphi 0, %s145
      %s163 = sphi 0, %s163
      %s165 = sphi 0, %s163
      %s166 = sphi 0, %s165
      %s180 = sphi 0, %s166
      %s184 = sphi 0, %s184
      %s186 = sphi 0, %s184
      %s187 = sphi 0, %s186
      %s201 = sphi 0, %s187
      %s205 = sphi 0, %s205
      %s207 = sphi 0, %s205
      %s208 = sphi 0, %s207
      %s222 = sphi 0, %s208
      %s226 = sphi 0, %s226
      %s228 = sphi 0, %s226
      %s229 = sphi 0, %s228
      %s243 = sphi 0, %s229
      %s247 = sphi 0, %s247
      %s249 = sphi 0, %s247
      %s250 = sphi 0, %s249
      %s264 = sphi 0, %s250
      %s268 = sphi 0, %s268
      %s270 = sphi 0, %s268
      %s271 = sphi 0, %s270
      %s285 = sphi 0, %s271
      %s289 = sphi 0, %s289
      %s291 = sphi 0, %s289
      %s292 = sphi 0, %s291
      %s306 = sphi 0, %s292
      %s310 = sphi 0, %s310
      %s312 = sphi 0, %s310
      %s313 = sphi 0, %s312
      %s327 = sphi 0, %s313
      %s331 = sphi 0, %s331
      %s333 = sphi 0, %s331
      %s334 = sphi 0, %s333
      %s348 = sphi 0, %s334
      %s354 = sphi 0, %s356
      %s357 = sphi 0, %s354
      %s358 = sphi 0, %s357
      %s374 = sphi 0, %s358
    $region4: #{enhanced_transformer_block.1} parent=1 // loop_header_branch
      %27 = sbr.rel (%p25) target = $region8
    $region5: #{enhanced_transformer_block.1} parent=1 // loop_body
      %s29 = ssub.s32 %s24, 1
      %s30 = ssub.s32 %s24, 2
      %s31 = sadd.s32 %s24, 1
      %s32 = ssub.s32 %s24, %s31
      %p33 = scmp.eq.s32.totalorder %s32, 0
      %s35 = sadd.s32 %s34, 1
      %s36 = scalar_select %p33, %s34, %s35
      %p39 = pneg %p33
      %p40 = scmp.eq.s32.totalorder %s24, 1
      %p41 = por %p39, %p40
      %p42 = scmp.ne.s32.totalorder %s34, %s37
      %p43 = scmp.eq.s32.totalorder %s24, 0
      %p44 = por %p42, %p43
      %p45 = scmp.ne.s32.totalorder %s34, %s37
      %p46 = scmp.eq.s32.totalorder %s29, 1
      %p47 = por %p45, %p46
      %p48 = scmp.ne.s32.totalorder %s37, %s38
      %p49 = scmp.eq.s32.totalorder %s29, 0
      %p50 = por %p48, %p49
      %p51 = scmp.ne.s32.totalorder %s37, %s38
      %p52 = scmp.eq.s32.totalorder %s30, 1
      %p53 = por %p51, %p52
      %p55 = scmp.ne.s32.totalorder %s38, %s54
      %p56 = scmp.eq.s32.totalorder %s30, 0
      %p57 = por %p55, %p56
      %s59 = sadd.s32 %s58, 1
      %p62 = scmp.eq.s32.totalorder %s24, 1
      %p63 = scmp.ne.s32.totalorder %s58, %s60
      %p64 = scmp.eq.s32.totalorder %s24, 0
      %p65 = por %p63, %p64
      %p66 = scmp.ne.s32.totalorder %s58, %s60
      %p67 = scmp.eq.s32.totalorder %s29, 1
      %p68 = por %p66, %p67
      %p69 = scmp.ne.s32.totalorder %s60, %s61
      %p70 = scmp.eq.s32.totalorder %s29, 0
      %p71 = por %p69, %p70
      %p72 = scmp.ne.s32.totalorder %s60, %s61
      %p73 = scmp.eq.s32.totalorder %s30, 1
      %p74 = por %p72, %p73
      %p76 = scmp.ne.s32.totalorder %s61, %s75
      %p77 = scmp.eq.s32.totalorder %s30, 0
      %p78 = por %p76, %p77
      %s80 = sadd.s32 %s79, 1
      %p83 = scmp.eq.s32.totalorder %s24, 1
      %p84 = scmp.ne.s32.totalorder %s79, %s81
      %p85 = scmp.eq.s32.totalorder %s24, 0
      %p86 = por %p84, %p85
      %p87 = scmp.ne.s32.totalorder %s79, %s81
      %p88 = scmp.eq.s32.totalorder %s29, 1
      %p89 = por %p87, %p88
      %p90 = scmp.ne.s32.totalorder %s81, %s82
      %p91 = scmp.eq.s32.totalorder %s29, 0
      %p92 = por %p90, %p91
      %p93 = scmp.ne.s32.totalorder %s81, %s82
      %p94 = scmp.eq.s32.totalorder %s30, 1
      %p95 = por %p93, %p94
      %p97 = scmp.ne.s32.totalorder %s82, %s96
      %p98 = scmp.eq.s32.totalorder %s30, 0
      %p99 = por %p97, %p98
      %s101 = sadd.s32 %s100, 1
      %p104 = scmp.eq.s32.totalorder %s24, 1
      %p105 = scmp.ne.s32.totalorder %s100, %s102
      %p106 = scmp.eq.s32.totalorder %s24, 0
      %p107 = por %p105, %p106
      %p108 = scmp.ne.s32.totalorder %s100, %s102
      %p109 = scmp.eq.s32.totalorder %s29, 1
      %p110 = por %p108, %p109
      %p111 = scmp.ne.s32.totalorder %s102, %s103
      %p112 = scmp.eq.s32.totalorder %s29, 0
      %p113 = por %p111, %p112
      %p114 = scmp.ne.s32.totalorder %s102, %s103
      %p115 = scmp.eq.s32.totalorder %s30, 1
      %p116 = por %p114, %p115
      %p118 = scmp.ne.s32.totalorder %s103, %s117
      %p119 = scmp.eq.s32.totalorder %s30, 0
      %p120 = por %p118, %p119
      %s122 = sadd.s32 %s121, 1
      %p125 = scmp.eq.s32.totalorder %s24, 1
      %p126 = scmp.ne.s32.totalorder %s121, %s123
      %p127 = scmp.eq.s32.totalorder %s24, 0
      %p128 = por %p126, %p127
      %p129 = scmp.ne.s32.totalorder %s121, %s123
      %p130 = scmp.eq.s32.totalorder %s29, 1
      %p131 = por %p129, %p130
      %p132 = scmp.ne.s32.totalorder %s123, %s124
      %p133 = scmp.eq.s32.totalorder %s29, 0
      %p134 = por %p132, %p133
      %p135 = scmp.ne.s32.totalorder %s123, %s124
      %p136 = scmp.eq.s32.totalorder %s30, 1
      %p137 = por %p135, %p136
      %p139 = scmp.ne.s32.totalorder %s124, %s138
      %p140 = scmp.eq.s32.totalorder %s30, 0
      %p141 = por %p139, %p140
      %s143 = sadd.s32 %s142, 1
      %p146 = scmp.eq.s32.totalorder %s24, 1
      %p147 = scmp.ne.s32.totalorder %s142, %s144
      %p148 = scmp.eq.s32.totalorder %s24, 0
      %p149 = por %p147, %p148
      %p150 = scmp.ne.s32.totalorder %s142, %s144
      %p151 = scmp.eq.s32.totalorder %s29, 1
      %p152 = por %p150, %p151
      %p153 = scmp.ne.s32.totalorder %s144, %s145
      %p154 = scmp.eq.s32.totalorder %s29, 0
      %p155 = por %p153, %p154
      %p156 = scmp.ne.s32.totalorder %s144, %s145
      %p157 = scmp.eq.s32.totalorder %s30, 1
      %p158 = por %p156, %p157
      %p160 = scmp.ne.s32.totalorder %s145, %s159
      %p161 = scmp.eq.s32.totalorder %s30, 0
      %p162 = por %p160, %p161
      %s164 = sadd.s32 %s163, 1
      %p167 = scmp.eq.s32.totalorder %s24, 1
      %p168 = scmp.ne.s32.totalorder %s163, %s165
      %p169 = scmp.eq.s32.totalorder %s24, 0
      %p170 = por %p168, %p169
      %p171 = scmp.ne.s32.totalorder %s163, %s165
      %p172 = scmp.eq.s32.totalorder %s29, 1
      %p173 = por %p171, %p172
      %p174 = scmp.ne.s32.totalorder %s165, %s166
      %p175 = scmp.eq.s32.totalorder %s29, 0
      %p176 = por %p174, %p175
      %p177 = scmp.ne.s32.totalorder %s165, %s166
      %p178 = scmp.eq.s32.totalorder %s30, 1
      %p179 = por %p177, %p178
      %p181 = scmp.ne.s32.totalorder %s166, %s180
      %p182 = scmp.eq.s32.totalorder %s30, 0
      %p183 = por %p181, %p182
      %s185 = sadd.s32 %s184, 1
      %p188 = scmp.eq.s32.totalorder %s24, 1
      %p189 = scmp.ne.s32.totalorder %s184, %s186
      %p190 = scmp.eq.s32.totalorder %s24, 0
      %p191 = por %p189, %p190
      %p192 = scmp.ne.s32.totalorder %s184, %s186
      %p193 = scmp.eq.s32.totalorder %s29, 1
      %p194 = por %p192, %p193
      %p195 = scmp.ne.s32.totalorder %s186, %s187
      %p196 = scmp.eq.s32.totalorder %s29, 0
      %p197 = por %p195, %p196
      %p198 = scmp.ne.s32.totalorder %s186, %s187
      %p199 = scmp.eq.s32.totalorder %s30, 1
      %p200 = por %p198, %p199
      %p202 = scmp.ne.s32.totalorder %s187, %s201
      %p203 = scmp.eq.s32.totalorder %s30, 0
      %p204 = por %p202, %p203
      %s206 = sadd.s32 %s205, 1
      %p209 = scmp.eq.s32.totalorder %s24, 1
      %p210 = scmp.ne.s32.totalorder %s205, %s207
      %p211 = scmp.eq.s32.totalorder %s24, 0
      %p212 = por %p210, %p211
      %p213 = scmp.ne.s32.totalorder %s205, %s207
      %p214 = scmp.eq.s32.totalorder %s29, 1
      %p215 = por %p213, %p214
      %p216 = scmp.ne.s32.totalorder %s207, %s208
      %p217 = scmp.eq.s32.totalorder %s29, 0
      %p218 = por %p216, %p217
      %p219 = scmp.ne.s32.totalorder %s207, %s208
      %p220 = scmp.eq.s32.totalorder %s30, 1
      %p221 = por %p219, %p220
      %p223 = scmp.ne.s32.totalorder %s208, %s222
      %p224 = scmp.eq.s32.totalorder %s30, 0
      %p225 = por %p223, %p224
      %s227 = sadd.s32 %s226, 1
      %p230 = scmp.eq.s32.totalorder %s24, 1
      %p231 = scmp.ne.s32.totalorder %s226, %s228
      %p232 = scmp.eq.s32.totalorder %s24, 0
      %p233 = por %p231, %p232
      %p234 = scmp.ne.s32.totalorder %s226, %s228
      %p235 = scmp.eq.s32.totalorder %s29, 1
      %p236 = por %p234, %p235
      %p237 = scmp.ne.s32.totalorder %s228, %s229
      %p238 = scmp.eq.s32.totalorder %s29, 0
      %p239 = por %p237, %p238
      %p240 = scmp.ne.s32.totalorder %s228, %s229
      %p241 = scmp.eq.s32.totalorder %s30, 1
      %p242 = por %p240, %p241
      %p244 = scmp.ne.s32.totalorder %s229, %s243
      %p245 = scmp.eq.s32.totalorder %s30, 0
      %p246 = por %p244, %p245
      %s248 = sadd.s32 %s247, 1
      %p251 = scmp.eq.s32.totalorder %s24, 1
      %p252 = scmp.ne.s32.totalorder %s247, %s249
      %p253 = scmp.eq.s32.totalorder %s24, 0
      %p254 = por %p252, %p253
      %p255 = scmp.ne.s32.totalorder %s247, %s249
      %p256 = scmp.eq.s32.totalorder %s29, 1
      %p257 = por %p255, %p256
      %p258 = scmp.ne.s32.totalorder %s249, %s250
      %p259 = scmp.eq.s32.totalorder %s29, 0
      %p260 = por %p258, %p259
      %p261 = scmp.ne.s32.totalorder %s249, %s250
      %p262 = scmp.eq.s32.totalorder %s30, 1
      %p263 = por %p261, %p262
      %p265 = scmp.ne.s32.totalorder %s250, %s264
      %p266 = scmp.eq.s32.totalorder %s30, 0
      %p267 = por %p265, %p266
      %s269 = sadd.s32 %s268, 1
      %p272 = scmp.eq.s32.totalorder %s24, 1
      %p273 = scmp.ne.s32.totalorder %s268, %s270
      %p274 = scmp.eq.s32.totalorder %s24, 0
      %p275 = por %p273, %p274
      %p276 = scmp.ne.s32.totalorder %s268, %s270
      %p277 = scmp.eq.s32.totalorder %s29, 1
      %p278 = por %p276, %p277
      %p279 = scmp.ne.s32.totalorder %s270, %s271
      %p280 = scmp.eq.s32.totalorder %s29, 0
      %p281 = por %p279, %p280
      %p282 = scmp.ne.s32.totalorder %s270, %s271
      %p283 = scmp.eq.s32.totalorder %s30, 1
      %p284 = por %p282, %p283
      %p286 = scmp.ne.s32.totalorder %s271, %s285
      %p287 = scmp.eq.s32.totalorder %s30, 0
      %p288 = por %p286, %p287
      %s290 = sadd.s32 %s289, 1
      %p293 = scmp.eq.s32.totalorder %s24, 1
      %p294 = scmp.ne.s32.totalorder %s289, %s291
      %p295 = scmp.eq.s32.totalorder %s24, 0
      %p296 = por %p294, %p295
      %p297 = scmp.ne.s32.totalorder %s289, %s291
      %p298 = scmp.eq.s32.totalorder %s29, 1
      %p299 = por %p297, %p298
      %p300 = scmp.ne.s32.totalorder %s291, %s292
      %p301 = scmp.eq.s32.totalorder %s29, 0
      %p302 = por %p300, %p301
      %p303 = scmp.ne.s32.totalorder %s291, %s292
      %p304 = scmp.eq.s32.totalorder %s30, 1
      %p305 = por %p303, %p304
      %p307 = scmp.ne.s32.totalorder %s292, %s306
      %p308 = scmp.eq.s32.totalorder %s30, 0
      %p309 = por %p307, %p308
      %s311 = sadd.s32 %s310, 1
      %p314 = scmp.eq.s32.totalorder %s24, 1
      %p315 = scmp.ne.s32.totalorder %s310, %s312
      %p316 = scmp.eq.s32.totalorder %s24, 0
      %p317 = por %p315, %p316
      %p318 = scmp.ne.s32.totalorder %s310, %s312
      %p319 = scmp.eq.s32.totalorder %s29, 1
      %p320 = por %p318, %p319
      %p321 = scmp.ne.s32.totalorder %s312, %s313
      %p322 = scmp.eq.s32.totalorder %s29, 0
      %p323 = por %p321, %p322
      %p324 = scmp.ne.s32.totalorder %s312, %s313
      %p325 = scmp.eq.s32.totalorder %s30, 1
      %p326 = por %p324, %p325
      %p328 = scmp.ne.s32.totalorder %s313, %s327
      %p329 = scmp.eq.s32.totalorder %s30, 0
      %p330 = por %p328, %p329
      %s332 = sadd.s32 %s331, 1
      %p335 = scmp.eq.s32.totalorder %s24, 1
      %p336 = scmp.ne.s32.totalorder %s331, %s333
      %p337 = scmp.eq.s32.totalorder %s24, 0
      %p338 = por %p336, %p337
      %p339 = scmp.ne.s32.totalorder %s331, %s333
      %p340 = scmp.eq.s32.totalorder %s29, 1
      %p341 = por %p339, %p340
      %p342 = scmp.ne.s32.totalorder %s333, %s334
      %p343 = scmp.eq.s32.totalorder %s29, 0
      %p344 = por %p342, %p343
      %p345 = scmp.ne.s32.totalorder %s333, %s334
      %p346 = scmp.eq.s32.totalorder %s30, 1
      %p347 = por %p345, %p346
      %p349 = scmp.ne.s32.totalorder %s334, %s348
      %p350 = scmp.eq.s32.totalorder %s30, 0
      %p351 = por %p349, %p350
      %s352 = ssub.s32 %s24, %s31
      %p353 = scmp.eq.s32.totalorder %s352, 0
      %s355 = sadd.s32 %s354, 1
      %s356 = scalar_select %p353, %s354, %s355
      %p359 = pneg %p353
      %p360 = scmp.eq.s32.totalorder %s24, 1
      %p361 = por %p359, %p360
      %p362 = scmp.ne.s32.totalorder %s354, %s357
      %p363 = scmp.eq.s32.totalorder %s24, 0
      %p364 = por %p362, %p363
      %p365 = scmp.ne.s32.totalorder %s354, %s357
      %p366 = scmp.eq.s32.totalorder %s29, 1
      %p367 = por %p365, %p366
      %p368 = scmp.ne.s32.totalorder %s357, %s358
      %p369 = scmp.eq.s32.totalorder %s29, 0
      %p370 = por %p368, %p369
      %p371 = scmp.ne.s32.totalorder %s357, %s358
      %p372 = scmp.eq.s32.totalorder %s30, 1
      %p373 = por %p371, %p372
      %p375 = scmp.ne.s32.totalorder %s358, %s374
      %p376 = scmp.eq.s32.totalorder %s30, 0
      %p377 = por %p375, %p376
      %p378 = scmp.le.s32.totalorder 1, %s24
      %p379 = scmp.lt.s32.totalorder %s24, 3
      %p380 = pnand %p378, %p379
      %p381 = pneg %p380
      // Predicated region
      $region9: #{enhanced_transformer_block.1} parent=5 // pred_check
        _
      $region10: #{enhanced_transformer_block.1} parent=5 // pred_check_branch
        %383 = sbr.rel (%p380) target = $region12
      $region11: #{enhanced_transformer_block.1} parent=5 // pred_region
        %s384 = ssub.s32 %s24, 1
        // Predicated region
        $region13: #{enhanced_transformer_block.1} parent=11 // pred_check
          %p385 = pneg %p71
        $region14: #{enhanced_transformer_block.1} parent=11 // pred_check_branch
          %387 = sbr.rel (%p385) target = $region16
        $region15: #{enhanced_transformer_block.1} parent=11 // pred_region
          _
        $region16: #{enhanced_transformer_block.1} parent=11 // pred_fallthru
          _
        // Predicated region
        $region17: #{enhanced_transformer_block.1} parent=11 // pred_check
          %p388 = pneg %p92
        $region18: #{enhanced_transformer_block.1} parent=11 // pred_check_branch
          %390 = sbr.rel (%p388) target = $region20
        $region19: #{enhanced_transformer_block.1} parent=11 // pred_region
          _
        $region20: #{enhanced_transformer_block.1} parent=11 // pred_fallthru
          _
        // Predicated region
        $region21: #{enhanced_transformer_block.1} parent=11 // pred_check
          %p391 = pneg %p113
        $region22: #{enhanced_transformer_block.1} parent=11 // pred_check_branch
          %393 = sbr.rel (%p391) target = $region24
        $region23: #{enhanced_transformer_block.1} parent=11 // pred_region
          _
        $region24: #{enhanced_transformer_block.1} parent=11 // pred_fallthru
          _
        // Predicated region
        $region25: #{enhanced_transformer_block.1} parent=11 // pred_check
          %p394 = pneg %p134
        $region26: #{enhanced_transformer_block.1} parent=11 // pred_check_branch
          %396 = sbr.rel (%p394) target = $region28
        $region27: #{enhanced_transformer_block.1} parent=11 // pred_region
          _
        $region28: #{enhanced_transformer_block.1} parent=11 // pred_fallthru
          _
        // Predicated region
        $region29: #{enhanced_transformer_block.1} parent=11 // pred_check
          %p397 = pneg %p155
        $region30: #{enhanced_transformer_block.1} parent=11 // pred_check_branch
          %399 = sbr.rel (%p397) target = $region32
        $region31: #{enhanced_transformer_block.1} parent=11 // pred_region
          _
        $region32: #{enhanced_transformer_block.1} parent=11 // pred_fallthru
          _
        // Predicated region
        $region33: #{enhanced_transformer_block.1} parent=11 // pred_check
          %p400 = pneg %p176
        $region34: #{enhanced_transformer_block.1} parent=11 // pred_check_branch
          %402 = sbr.rel (%p400) target = $region36
        $region35: #{enhanced_transformer_block.1} parent=11 // pred_region
          _
        $region36: #{enhanced_transformer_block.1} parent=11 // pred_fallthru
          _
        // Predicated region
        $region37: #{enhanced_transformer_block.1} parent=11 // pred_check
          %p403 = pneg %p197
        $region38: #{enhanced_transformer_block.1} parent=11 // pred_check_branch
          %405 = sbr.rel (%p403) target = $region40
        $region39: #{enhanced_transformer_block.1} parent=11 // pred_region
          _
        $region40: #{enhanced_transformer_block.1} parent=11 // pred_fallthru
          _
        // Predicated region
        $region41: #{enhanced_transformer_block.1} parent=11 // pred_check
          %p406 = pneg %p218
        $region42: #{enhanced_transformer_block.1} parent=11 // pred_check_branch
          %408 = sbr.rel (%p406) target = $region44
        $region43: #{enhanced_transformer_block.1} parent=11 // pred_region
          _
        $region44: #{enhanced_transformer_block.1} parent=11 // pred_fallthru
          _
        // Predicated region
        $region45: #{enhanced_transformer_block.1} parent=11 // pred_check
          %p409 = pneg %p239
        $region46: #{enhanced_transformer_block.1} parent=11 // pred_check_branch
          %411 = sbr.rel (%p409) target = $region48
        $region47: #{enhanced_transformer_block.1} parent=11 // pred_region
          _
        $region48: #{enhanced_transformer_block.1} parent=11 // pred_fallthru
          _
        // Predicated region
        $region49: #{enhanced_transformer_block.1} parent=11 // pred_check
          %p412 = pneg %p260
        $region50: #{enhanced_transformer_block.1} parent=11 // pred_check_branch
          %414 = sbr.rel (%p412) target = $region52
        $region51: #{enhanced_transformer_block.1} parent=11 // pred_region
          _
        $region52: #{enhanced_transformer_block.1} parent=11 // pred_fallthru
          _
        // Predicated region
        $region53: #{enhanced_transformer_block.1} parent=11 // pred_check
          %p415 = pneg %p281
        $region54: #{enhanced_transformer_block.1} parent=11 // pred_check_branch
          %417 = sbr.rel (%p415) target = $region56
        $region55: #{enhanced_transformer_block.1} parent=11 // pred_region
          _
        $region56: #{enhanced_transformer_block.1} parent=11 // pred_fallthru
          _
        // Predicated region
        $region57: #{enhanced_transformer_block.1} parent=11 // pred_check
          %p418 = pneg %p302
        $region58: #{enhanced_transformer_block.1} parent=11 // pred_check_branch
          %420 = sbr.rel (%p418) target = $region60
        $region59: #{enhanced_transformer_block.1} parent=11 // pred_region
          _
        $region60: #{enhanced_transformer_block.1} parent=11 // pred_fallthru
          _
        // Predicated region
        $region61: #{enhanced_transformer_block.1} parent=11 // pred_check
          %p421 = pneg %p323
        $region62: #{enhanced_transformer_block.1} parent=11 // pred_check_branch
          %423 = sbr.rel (%p421) target = $region64
        $region63: #{enhanced_transformer_block.1} parent=11 // pred_region
          _
        $region64: #{enhanced_transformer_block.1} parent=11 // pred_fallthru
          _
        // Predicated region
        $region65: #{enhanced_transformer_block.1} parent=11 // pred_check
          %p424 = pneg %p344
        $region66: #{enhanced_transformer_block.1} parent=11 // pred_check_branch
          %426 = sbr.rel (%p424) target = $region68
        $region67: #{enhanced_transformer_block.1} parent=11 // pred_region
          _
        $region68: #{enhanced_transformer_block.1} parent=11 // pred_fallthru
          _
      $region12: #{enhanced_transformer_block.1} parent=5 // pred_fallthru
        _
      %p427 = scmp.lt.s32.totalorder %s24, 2
      // Predicated region
      $region69: #{enhanced_transformer_block.1} parent=5 // pred_check
        %p428 = pneg %p427
      $region70: #{enhanced_transformer_block.1} parent=5 // pred_check_branch
        %430 = sbr.rel (%p428) target = $region72
      $region71: #{enhanced_transformer_block.1} parent=5 // pred_region
        // Predicated region
        $region73: #{enhanced_transformer_block.1} parent=71 // pred_check
          %p431 = pneg %p44
        $region74: #{enhanced_transformer_block.1} parent=71 // pred_check_branch
          %433 = sbr.rel (%p431) target = $region76
        $region75: #{enhanced_transformer_block.1} parent=71 // pred_region
          %p434 = scmp.lt.s32.totalorder %s24, 1
          %s435 = scalar_select %p434, %s24, 1
          %s436 = smul.addr %s435, 8
          %s437 = scalar_lea.vmem %s0, %s436
        $region76: #{enhanced_transformer_block.1} parent=71 // pred_fallthru
          _
      $region72: #{enhanced_transformer_block.1} parent=5 // pred_fallthru
        _
      %p438 = scmp.le.s32.totalorder 1, %s24
      %p439 = scmp.lt.s32.totalorder %s24, 3
      %p440 = pnand %p438, %p439
      %p441 = pneg %p440
      // Predicated region
      $region77: #{enhanced_transformer_block.1} parent=5 // pred_check
        _
      $region78: #{enhanced_transformer_block.1} parent=5 // pred_check_branch
        %443 = sbr.rel (%p440) target = $region80
      $region79: #{enhanced_transformer_block.1} parent=5 // pred_region
        %s444 = ssub.s32 %s24, 1
        %p445 = scmp.lt.s32.totalorder %s29, 1
        %s446 = scalar_select %p445, %s29, 1
        %s447 = smul.addr %s446, 8
        %s448 = scalar_lea.vmem %s0, %s447
        %p449 = pneg %p50
        %p450 = pneg %p47
        %p451 = pneg %p71
        %p452 = pneg %p68
        %p453 = pneg %p92
        %p454 = pneg %p89
        %p455 = pneg %p113
        %p456 = pneg %p110
        %p457 = pneg %p134
        %p458 = pneg %p131
        %p459 = pneg %p155
        %p460 = pneg %p152
        %p461 = pneg %p176
        %p462 = pneg %p173
        %p463 = pneg %p197
        %p464 = pneg %p194
        %p465 = pneg %p218
        %p466 = pneg %p215
        %p467 = pneg %p239
        %p468 = pneg %p236
        %p469 = pneg %p260
        %p470 = pneg %p257
        %p471 = pneg %p281
        %p472 = pneg %p278
        %p473 = pneg %p302
        %p474 = pneg %p299
        %p475 = pneg %p323
        %p476 = pneg %p320
        %p477 = pneg %p344
        %p478 = pneg %p341
        %p479 = pneg %p370
        %p480 = pneg %p367
        %s481 = sand.u32 %s357, 1
        %s482 = scalar_lea.sflag [#allocation3], %s481
        %s483 = sand.u32 %s357, 1
        %s484 = smul.addr %s483, 8
        %s485 = scalar_lea.vmem [#allocation2], %s484
        %p486 = scmp.lt.s32.totalorder %s29, 1
        %s487 = scalar_select %p486, %s29, 1
        %s488 = smul.addr %s487, 8
        %s489 = scalar_lea.vmem %s0, %s488
        %v491 = vld [vmem:[%s489] sm:$0xff]
        %v492 = vld [vmem:[%s1] sm:$0x1]
        %v493 = vld [vmem:[%s2] sm:$0x1]
        %vm494 = vcmask 261120
        %v495 = vsel %vm494, %v491, 0.0
        %496 = vadd.xlane.f32.xlu0 %v495
        %v497 = vpop.xlane.xlu0 %496
        %v498 = vrcp.pop 32.0
        %v499 = vmul.f32 %v497, %v498
        %v500 = vsub.f32 %v491, %v499
        %v501 = vmul.f32 %v500, %v500
        %v502 = vsel %vm494, %v501, 0.0
        %503 = vadd.xlane.f32.xlu0 %v502
        %v504 = vpop.xlane.xlu0 %503
        %v505 = vmul.f32 %v504, %v498
        %v506 = vadd.f32 %v505, 1e-05
        %v507 = vrsqrt.pop %v506
        %v508 = vmul.f32 %v500, %v507
        %v510 = vlaneseq
        %v511 = vshrl.u32 %v510, 7
        %v512 = vsub.s32 0, %v511
        %v513 = vrot.slane %v492, %v512
        %v515 = vmul.f32 %v508, %v513
        %v517 = vlaneseq
        %v518 = vshrl.u32 %v517, 7
        %v519 = vsub.s32 0, %v518
        %v520 = vrot.slane %v493, %v519
        %v522 = vadd.f32 %v515, %v520
        %v523 = vpack.c.bf16 %v522, %v522
        %v524 = vld [vmem:[%s3] sm:$0xf]
        %v525 = vld [vmem:[%s3 + $0x4] sm:$0xf]
        %v526 = vld [vmem:[%s3 + $0x8] sm:$0xf]
        %v527 = vld [vmem:[%s3 + $0xc] sm:$0xf]
        %v528 = vld [vmem:[%s4] sm:$0x1]
        %v530 = vlaneseq
        %v531 = vshrl.u32 %v530, 7
        %v532 = vsub.s32 0, %v531
        %v533 = vrot.slane %v528, %v532
        %v539 = vunpack.c.l.b16 %v524
        %v540 = vunpack.c.l.b16 %v525
        %v541 = vunpack.c.l.b16 %v526
        %v542 = vunpack.c.l.b16 %v527
        %v543 = vpack.c.b16 %v540, %v539
        %v544 = vpack.c.b16 %v542, %v541
        %v548 = vsel %vm494, %v523, 0
        %550 = vmatprep.subr.bf16.mxu0 0
        %551 = vmatpush1.bf16.msra.mxu0 %v543
        %552 = vmatprep.subr.bf16.mxu0 0
        %553 = vmatpush1.bf16.msra.mxu0 %v544
        %554 = vmatprep.subr.bf16.mxu0 0
        %555 = vmatpush1.bf16.msra.mxu0 0
        %556 = vmatprep.subr.bf16.mxu0 0
        %557 = vmatpush1.bf16.msra.mxu0 0
        %558 = vmatprep.subr.bf16.mxu0 0
        %559 = vmatpush1.bf16.msra.mxu0 0
        %560 = vmatprep.subr.bf16.mxu0 0
        %561 = vmatpush1.bf16.msra.mxu0 0
        %562 = vmatprep.subr.bf16.mxu0 0
        %563 = vmatpush1.bf16.msra.mxu0 0
        %564 = vmatprep.subr.bf16.mxu0 0
        %565 = vmatpush1.bf16.msra.mxu0 0
        %566 = vmatprep.subr.bf16.mxu0 0
        %567 = vmatpush1.bf16.msra.mxu0 0
        %568 = vmatprep.subr.bf16.mxu0 0
        %569 = vmatpush1.bf16.msra.mxu0 0
        %570 = vmatprep.subr.bf16.mxu0 0
        %571 = vmatpush1.bf16.msra.mxu0 0
        %572 = vmatprep.subr.bf16.mxu0 0
        %573 = vmatpush1.bf16.msra.mxu0 0
        %574 = vmatprep.subr.bf16.mxu0 0
        %575 = vmatpush1.bf16.msra.mxu0 0
        %576 = vmatprep.subr.bf16.mxu0 0
        %577 = vmatpush1.bf16.msra.mxu0 0
        %578 = vmatprep.subr.bf16.mxu0 0
        %579 = vmatpush1.bf16.msra.mxu0 0
        %580 = vmatprep.subr.bf16.mxu0 0
        %581 = vmatpush1.bf16.msra.mxu0 0
        %582 = vmatprep.mubr.bf16.mxu0 0
        %583 = vmatmul.mubr.bf16.gmra.mrb[0].mxu0 %v548
        %v584 = vpop.f32.mrb[0].mxu0
        %v585 = vadd.f32 %v533, %v584
        %v586 = vpop.f32.mrb[0].mxu0
        %v587 = vpop.f32.mrb[0].mxu0
        %v588 = vpop.f32.mrb[0].mxu0
        %589 = vdwg.mxu0
        %v590 = vmul.f32 %v585, 0.35355338
        %592 = vrot.lane.b32.xlu0 %v590, 120
        %v593 = vpop.permute.xlu0 %592
        %595 = vrot.lane.b32.xlu0 %v590, 112
        %v596 = vpop.permute.xlu0 %595
        %598 = vrot.lane.b32.xlu0 %v590, 104
        %v599 = vpop.permute.xlu0 %598
        %v601 = vpack.c.bf16 %v590, %v590
        %v602 = vpack.c.bf16 %v593, %v593
        %v603 = vpack.c.bf16 %v596, %v596
        %v604 = vpack.c.bf16 %v599, %v599
        %606 = vrot.lane.b32.xlu0 %v585, 120
        %v607 = vpop.permute.xlu0 %606
        %609 = vrot.lane.b32.xlu0 %v585, 112
        %v610 = vpop.permute.xlu0 %609
        %612 = vrot.lane.b32.xlu0 %v585, 104
        %v613 = vpop.permute.xlu0 %612
        %v615 = vpack.c.bf16 %v585, %v585
        %v616 = vpack.c.bf16 %v607, %v607
        %v617 = vpack.c.bf16 %v610, %v610
        %v618 = vpack.c.bf16 %v613, %v613
        %620 = vrot.lane.b32.xlu0 %v615, 96
        %v621 = vpop.permute.xlu0 %620
        %vm622 = vcmask 64512
        %v624 = vsel %vm622, %v601, 0
        %v627 = vsel %vm622, %v621, 0
        %629 = vmatprep.subr.bf16.mxu0 0
        %630 = vmatpush1.bf16.xpose.msra.mxu0 %v627
        %631 = vmatprep.subr.bf16.mxu0 0
        %632 = vmatpush1.bf16.xpose.msra.mxu0 0
        %633 = vmatprep.subr.bf16.mxu0 0
        %634 = vmatpush1.bf16.xpose.msra.mxu0 0
        %635 = vmatprep.subr.bf16.mxu0 0
        %636 = vmatpush1.bf16.xpose.msra.mxu0 0
        %637 = vmatprep.subr.bf16.mxu0 0
        %638 = vmatpush1.bf16.xpose.msra.mxu0 0
        %639 = vmatprep.subr.bf16.mxu0 0
        %640 = vmatpush1.bf16.xpose.msra.mxu0 0
        %641 = vmatprep.subr.bf16.mxu0 0
        %642 = vmatpush1.bf16.xpose.msra.mxu0 0
        %643 = vmatprep.subr.bf16.mxu0 0
        %644 = vmatpush1.bf16.xpose.msra.mxu0 0
        %645 = vmatprep.subr.bf16.mxu0 0
        %646 = vmatpush1.bf16.xpose.msra.mxu0 0
        %647 = vmatprep.subr.bf16.mxu0 0
        %648 = vmatpush1.bf16.xpose.msra.mxu0 0
        %649 = vmatprep.subr.bf16.mxu0 0
        %650 = vmatpush1.bf16.xpose.msra.mxu0 0
        %651 = vmatprep.subr.bf16.mxu0 0
        %652 = vmatpush1.bf16.xpose.msra.mxu0 0
        %653 = vmatprep.subr.bf16.mxu0 0
        %654 = vmatpush1.bf16.xpose.msra.mxu0 0
        %655 = vmatprep.subr.bf16.mxu0 0
        %656 = vmatpush1.bf16.xpose.msra.mxu0 0
        %657 = vmatprep.subr.bf16.mxu0 0
        %658 = vmatpush1.bf16.xpose.msra.mxu0 0
        %659 = vmatprep.subr.bf16.mxu0 0
        %660 = vmatpush1.bf16.xpose.msra.mxu0 0
        %661 = vmatprep.mubr.bf16.mxu0 0
        %662 = vmatmul.mubr.bf16.gmra.mrb[0].mxu0 %v624
        %v663 = vpop.f32.mrb[0].mxu0
        %v664 = vadd.f32 0.0, %v663
        %v665 = vpop.f32.mrb[0].mxu0
        %v666 = vpop.f32.mrb[0].mxu0
        %v667 = vpop.f32.mrb[0].mxu0
        %668 = vdwg.mxu0
        %670 = vrot.lane.b32.xlu0 %v616, 96
        %v671 = vpop.permute.xlu0 %670
        %v673 = vsel %vm622, %v602, 0
        %v676 = vsel %vm622, %v671, 0
        %678 = vmatprep.subr.bf16.mxu0 0
        %679 = vmatpush1.bf16.xpose.msra.mxu0 %v676
        %680 = vmatprep.subr.bf16.mxu0 0
        %681 = vmatpush1.bf16.xpose.msra.mxu0 0
        %682 = vmatprep.subr.bf16.mxu0 0
        %683 = vmatpush1.bf16.xpose.msra.mxu0 0
        %684 = vmatprep.subr.bf16.mxu0 0
        %685 = vmatpush1.bf16.xpose.msra.mxu0 0
        %686 = vmatprep.subr.bf16.mxu0 0
        %687 = vmatpush1.bf16.xpose.msra.mxu0 0
        %688 = vmatprep.subr.bf16.mxu0 0
        %689 = vmatpush1.bf16.xpose.msra.mxu0 0
        %690 = vmatprep.subr.bf16.mxu0 0
        %691 = vmatpush1.bf16.xpose.msra.mxu0 0
        %692 = vmatprep.subr.bf16.mxu0 0
        %693 = vmatpush1.bf16.xpose.msra.mxu0 0
        %694 = vmatprep.subr.bf16.mxu0 0
        %695 = vmatpush1.bf16.xpose.msra.mxu0 0
        %696 = vmatprep.subr.bf16.mxu0 0
        %697 = vmatpush1.bf16.xpose.msra.mxu0 0
        %698 = vmatprep.subr.bf16.mxu0 0
        %699 = vmatpush1.bf16.xpose.msra.mxu0 0
        %700 = vmatprep.subr.bf16.mxu0 0
        %701 = vmatpush1.bf16.xpose.msra.mxu0 0
        %702 = vmatprep.subr.bf16.mxu0 0
        %703 = vmatpush1.bf16.xpose.msra.mxu0 0
        %704 = vmatprep.subr.bf16.mxu0 0
        %705 = vmatpush1.bf16.xpose.msra.mxu0 0
        %706 = vmatprep.subr.bf16.mxu0 0
        %707 = vmatpush1.bf16.xpose.msra.mxu0 0
        %708 = vmatprep.subr.bf16.mxu0 0
        %709 = vmatpush1.bf16.xpose.msra.mxu0 0
        %710 = vmatprep.mubr.bf16.mxu0 0
        %711 = vmatmul.mubr.bf16.gmra.mrb[0].mxu0 %v673
        %v712 = vpop.f32.mrb[0].mxu0
        %v713 = vadd.f32 0.0, %v712
        %v714 = vpop.f32.mrb[0].mxu0
        %v715 = vpop.f32.mrb[0].mxu0
        %v716 = vpop.f32.mrb[0].mxu0
        %717 = vdwg.mxu0
        %719 = vrot.lane.b32.xlu0 %v617, 96
        %v720 = vpop.permute.xlu0 %719
        %v722 = vsel %vm622, %v603, 0
        %v725 = vsel %vm622, %v720, 0
        %727 = vmatprep.subr.bf16.mxu0 0
        %728 = vmatpush1.bf16.xpose.msra.mxu0 %v725
        %729 = vmatprep.subr.bf16.mxu0 0
        %730 = vmatpush1.bf16.xpose.msra.mxu0 0
        %731 = vmatprep.subr.bf16.mxu0 0
        %732 = vmatpush1.bf16.xpose.msra.mxu0 0
        %733 = vmatprep.subr.bf16.mxu0 0
        %734 = vmatpush1.bf16.xpose.msra.mxu0 0
        %735 = vmatprep.subr.bf16.mxu0 0
        %736 = vmatpush1.bf16.xpose.msra.mxu0 0
        %737 = vmatprep.subr.bf16.mxu0 0
        %738 = vmatpush1.bf16.xpose.msra.mxu0 0
        %739 = vmatprep.subr.bf16.mxu0 0
        %740 = vmatpush1.bf16.xpose.msra.mxu0 0
        %741 = vmatprep.subr.bf16.mxu0 0
        %742 = vmatpush1.bf16.xpose.msra.mxu0 0
        %743 = vmatprep.subr.bf16.mxu0 0
        %744 = vmatpush1.bf16.xpose.msra.mxu0 0
        %745 = vmatprep.subr.bf16.mxu0 0
        %746 = vmatpush1.bf16.xpose.msra.mxu0 0
        %747 = vmatprep.subr.bf16.mxu0 0
        %748 = vmatpush1.bf16.xpose.msra.mxu0 0
        %749 = vmatprep.subr.bf16.mxu0 0
        %750 = vmatpush1.bf16.xpose.msra.mxu0 0
        %751 = vmatprep.subr.bf16.mxu0 0
        %752 = vmatpush1.bf16.xpose.msra.mxu0 0
        %753 = vmatprep.subr.bf16.mxu0 0
        %754 = vmatpush1.bf16.xpose.msra.mxu0 0
        %755 = vmatprep.subr.bf16.mxu0 0
        %756 = vmatpush1.bf16.xpose.msra.mxu0 0
        %757 = vmatprep.subr.bf16.mxu0 0
        %758 = vmatpush1.bf16.xpose.msra.mxu0 0
        %759 = vmatprep.mubr.bf16.mxu0 0
        %760 = vmatmul.mubr.bf16.gmra.mrb[0].mxu0 %v722
        %v761 = vpop.f32.mrb[0].mxu0
        %v762 = vadd.f32 0.0, %v761
        %v763 = vpop.f32.mrb[0].mxu0
        %v764 = vpop.f32.mrb[0].mxu0
        %v765 = vpop.f32.mrb[0].mxu0
        %766 = vdwg.mxu0
        %768 = vrot.lane.b32.xlu0 %v618, 96
        %v769 = vpop.permute.xlu0 %768
        %v771 = vsel %vm622, %v604, 0
        %v774 = vsel %vm622, %v769, 0
        %776 = vmatprep.subr.bf16.mxu0 0
        %777 = vmatpush1.bf16.xpose.msra.mxu0 %v774
        %778 = vmatprep.subr.bf16.mxu0 0
        %779 = vmatpush1.bf16.xpose.msra.mxu0 0
        %780 = vmatprep.subr.bf16.mxu0 0
        %781 = vmatpush1.bf16.xpose.msra.mxu0 0
        %782 = vmatprep.subr.bf16.mxu0 0
        %783 = vmatpush1.bf16.xpose.msra.mxu0 0
        %784 = vmatprep.subr.bf16.mxu0 0
        %785 = vmatpush1.bf16.xpose.msra.mxu0 0
        %786 = vmatprep.subr.bf16.mxu0 0
        %787 = vmatpush1.bf16.xpose.msra.mxu0 0
        %788 = vmatprep.subr.bf16.mxu0 0
        %789 = vmatpush1.bf16.xpose.msra.mxu0 0
        %790 = vmatprep.subr.bf16.mxu0 0
        %791 = vmatpush1.bf16.xpose.msra.mxu0 0
        %792 = vmatprep.subr.bf16.mxu0 0
        %793 = vmatpush1.bf16.xpose.msra.mxu0 0
        %794 = vmatprep.subr.bf16.mxu0 0
        %795 = vmatpush1.bf16.xpose.msra.mxu0 0
        %796 = vmatprep.subr.bf16.mxu0 0
        %797 = vmatpush1.bf16.xpose.msra.mxu0 0
        %798 = vmatprep.subr.bf16.mxu0 0
        %799 = vmatpush1.bf16.xpose.msra.mxu0 0
        %800 = vmatprep.subr.bf16.mxu0 0
        %801 = vmatpush1.bf16.xpose.msra.mxu0 0
        %802 = vmatprep.subr.bf16.mxu0 0
        %803 = vmatpush1.bf16.xpose.msra.mxu0 0
        %804 = vmatprep.subr.bf16.mxu0 0
        %805 = vmatpush1.bf16.xpose.msra.mxu0 0
        %806 = vmatprep.subr.bf16.mxu0 0
        %807 = vmatpush1.bf16.xpose.msra.mxu0 0
        %808 = vmatprep.mubr.bf16.mxu0 0
        %809 = vmatmul.mubr.bf16.gmra.mrb[0].mxu0 %v771
        %v810 = vpop.f32.mrb[0].mxu0
        %v811 = vadd.f32 0.0, %v810
        %v812 = vpop.f32.mrb[0].mxu0
        %v813 = vpop.f32.mrb[0].mxu0
        %v814 = vpop.f32.mrb[0].mxu0
        %815 = vdwg.mxu0
        %v816 = vsel %vm622, %v664, -inf
        %817 = vmax.xlane.f32.xlu0 %v816
        %v818 = vpop.xlane.xlu0 %817
        %v819 = vsel %vm622, %v713, -inf
        %820 = vmax.xlane.f32.xlu0 %v819
        %v821 = vpop.xlane.xlu0 %820
        %v822 = vsel %vm622, %v762, -inf
        %823 = vmax.xlane.f32.xlu0 %v822
        %v824 = vpop.xlane.xlu0 %823
        %v825 = vsel %vm622, %v811, -inf
        %826 = vmax.xlane.f32.xlu0 %v825
        %v827 = vpop.xlane.xlu0 %826
        %v828 = vsub.f32 %v664, %v818
        %v829 = vsub.f32 %v713, %v821
        %v830 = vsub.f32 %v762, %v824
        %v831 = vsub.f32 %v811, %v827
        %v832 = vmul.f32 %v828, 1.442695
        %v833 = vpow.pop %v832
        %v834 = vmul.f32 %v829, 1.442695
        %v835 = vpow.pop %v834
        %v836 = vmul.f32 %v830, 1.442695
        %v837 = vpow.pop %v836
        %v838 = vmul.f32 %v831, 1.442695
        %v839 = vpow.pop %v838
        %v840 = vsel %vm622, %v833, 0.0
        %841 = vadd.xlane.f32.xlu0 %v840
        %v842 = vpop.xlane.xlu0 %841
        %v843 = vsel %vm622, %v835, 0.0
        %844 = vadd.xlane.f32.xlu0 %v843
        %v845 = vpop.xlane.xlu0 %844
        %v846 = vsel %vm622, %v837, 0.0
        %847 = vadd.xlane.f32.xlu0 %v846
        %v848 = vpop.xlane.xlu0 %847
        %v849 = vsel %vm622, %v839, 0.0
        %850 = vadd.xlane.f32.xlu0 %v849
        %v851 = vpop.xlane.xlu0 %850
        %v852 = vrcp.pop %v842
        %v853 = vrcp.pop %v845
        %v854 = vrcp.pop %v848
        %v855 = vrcp.pop %v851
        %v856 = vmul.f32 %v833, %v852
        %v857 = vmul.f32 %v835, %v853
        %v858 = vmul.f32 %v837, %v854
        %v859 = vmul.f32 %v839, %v855
        %v860 = vpack.c.bf16 %v856, %v856
        %v861 = vpack.c.bf16 %v857, %v857
        %v862 = vpack.c.bf16 %v858, %v858
        %v863 = vpack.c.bf16 %v859, %v859
        %864 = vrot.lane.b32.xlu0 %v615, 64
        %v865 = vpop.permute.xlu0 %864
        %v867 = vsel %vm622, %v860, 0
        %vm869 = vcmask 1043456
        %v871 = vsel %vm869, %v865, 0
        %873 = vmatprep.subr.bf16.mxu0 0
        %874 = vmatpush1.bf16.msra.mxu0 %v871
        %875 = vmatprep.subr.bf16.mxu0 0
        %876 = vmatpush1.bf16.msra.mxu0 0
        %877 = vmatprep.subr.bf16.mxu0 0
        %878 = vmatpush1.bf16.msra.mxu0 0
        %879 = vmatprep.subr.bf16.mxu0 0
        %880 = vmatpush1.bf16.msra.mxu0 0
        %881 = vmatprep.subr.bf16.mxu0 0
        %882 = vmatpush1.bf16.msra.mxu0 0
        %883 = vmatprep.subr.bf16.mxu0 0
        %884 = vmatpush1.bf16.msra.mxu0 0
        %885 = vmatprep.subr.bf16.mxu0 0
        %886 = vmatpush1.bf16.msra.mxu0 0
        %887 = vmatprep.subr.bf16.mxu0 0
        %888 = vmatpush1.bf16.msra.mxu0 0
        %889 = vmatprep.subr.bf16.mxu0 0
        %890 = vmatpush1.bf16.msra.mxu0 0
        %891 = vmatprep.subr.bf16.mxu0 0
        %892 = vmatpush1.bf16.msra.mxu0 0
        %893 = vmatprep.subr.bf16.mxu0 0
        %894 = vmatpush1.bf16.msra.mxu0 0
        %895 = vmatprep.subr.bf16.mxu0 0
        %896 = vmatpush1.bf16.msra.mxu0 0
        %897 = vmatprep.subr.bf16.mxu0 0
        %898 = vmatpush1.bf16.msra.mxu0 0
        %899 = vmatprep.subr.bf16.mxu0 0
        %900 = vmatpush1.bf16.msra.mxu0 0
        %901 = vmatprep.subr.bf16.mxu0 0
        %902 = vmatpush1.bf16.msra.mxu0 0
        %903 = vmatprep.subr.bf16.mxu0 0
        %904 = vmatpush1.bf16.msra.mxu0 0
        %905 = vmatprep.mubr.bf16.mxu0 0
        %906 = vmatmul.mubr.bf16.gmra.mrb[0].mxu0 %v867
        %v907 = vpop.f32.mrb[0].mxu0
        %v908 = vadd.f32 0.0, %v907
        %v909 = vpop.f32.mrb[0].mxu0
        %v910 = vpop.f32.mrb[0].mxu0
        %v911 = vpop.f32.mrb[0].mxu0
        %912 = vdwg.mxu0
        %913 = vrot.lane.b32.xlu0 %v616, 64
        %v914 = vpop.permute.xlu0 %913
        %v916 = vsel %vm622, %v861, 0
        %v919 = vsel %vm869, %v914, 0
        %921 = vmatprep.subr.bf16.mxu0 0
        %922 = vmatpush1.bf16.msra.mxu0 %v919
        %923 = vmatprep.subr.bf16.mxu0 0
        %924 = vmatpush1.bf16.msra.mxu0 0
        %925 = vmatprep.subr.bf16.mxu0 0
        %926 = vmatpush1.bf16.msra.mxu0 0
        %927 = vmatprep.subr.bf16.mxu0 0
        %928 = vmatpush1.bf16.msra.mxu0 0
        %929 = vmatprep.subr.bf16.mxu0 0
        %930 = vmatpush1.bf16.msra.mxu0 0
        %931 = vmatprep.subr.bf16.mxu0 0
        %932 = vmatpush1.bf16.msra.mxu0 0
        %933 = vmatprep.subr.bf16.mxu0 0
        %934 = vmatpush1.bf16.msra.mxu0 0
        %935 = vmatprep.subr.bf16.mxu0 0
        %936 = vmatpush1.bf16.msra.mxu0 0
        %937 = vmatprep.subr.bf16.mxu0 0
        %938 = vmatpush1.bf16.msra.mxu0 0
        %939 = vmatprep.subr.bf16.mxu0 0
        %940 = vmatpush1.bf16.msra.mxu0 0
        %941 = vmatprep.subr.bf16.mxu0 0
        %942 = vmatpush1.bf16.msra.mxu0 0
        %943 = vmatprep.subr.bf16.mxu0 0
        %944 = vmatpush1.bf16.msra.mxu0 0
        %945 = vmatprep.subr.bf16.mxu0 0
        %946 = vmatpush1.bf16.msra.mxu0 0
        %947 = vmatprep.subr.bf16.mxu0 0
        %948 = vmatpush1.bf16.msra.mxu0 0
        %949 = vmatprep.subr.bf16.mxu0 0
        %950 = vmatpush1.bf16.msra.mxu0 0
        %951 = vmatprep.subr.bf16.mxu0 0
        %952 = vmatpush1.bf16.msra.mxu0 0
        %953 = vmatprep.mubr.bf16.mxu0 0
        %954 = vmatmul.mubr.bf16.gmra.mrb[0].mxu0 %v916
        %v955 = vpop.f32.mrb[0].mxu0
        %v956 = vadd.f32 0.0, %v955
        %v957 = vpop.f32.mrb[0].mxu0
        %v958 = vpop.f32.mrb[0].mxu0
        %v959 = vpop.f32.mrb[0].mxu0
        %960 = vdwg.mxu0
        %961 = vrot.lane.b32.xlu0 %v617, 64
        %v962 = vpop.permute.xlu0 %961
        %v964 = vsel %vm622, %v862, 0
        %v967 = vsel %vm869, %v962, 0
        %969 = vmatprep.subr.bf16.mxu0 0
        %970 = vmatpush1.bf16.msra.mxu0 %v967
        %971 = vmatprep.subr.bf16.mxu0 0
        %972 = vmatpush1.bf16.msra.mxu0 0
        %973 = vmatprep.subr.bf16.mxu0 0
        %974 = vmatpush1.bf16.msra.mxu0 0
        %975 = vmatprep.subr.bf16.mxu0 0
        %976 = vmatpush1.bf16.msra.mxu0 0
        %977 = vmatprep.subr.bf16.mxu0 0
        %978 = vmatpush1.bf16.msra.mxu0 0
        %979 = vmatprep.subr.bf16.mxu0 0
        %980 = vmatpush1.bf16.msra.mxu0 0
        %981 = vmatprep.subr.bf16.mxu0 0
        %982 = vmatpush1.bf16.msra.mxu0 0
        %983 = vmatprep.subr.bf16.mxu0 0
        %984 = vmatpush1.bf16.msra.mxu0 0
        %985 = vmatprep.subr.bf16.mxu0 0
        %986 = vmatpush1.bf16.msra.mxu0 0
        %987 = vmatprep.subr.bf16.mxu0 0
        %988 = vmatpush1.bf16.msra.mxu0 0
        %989 = vmatprep.subr.bf16.mxu0 0
        %990 = vmatpush1.bf16.msra.mxu0 0
        %991 = vmatprep.subr.bf16.mxu0 0
        %992 = vmatpush1.bf16.msra.mxu0 0
        %993 = vmatprep.subr.bf16.mxu0 0
        %994 = vmatpush1.bf16.msra.mxu0 0
        %995 = vmatprep.subr.bf16.mxu0 0
        %996 = vmatpush1.bf16.msra.mxu0 0
        %997 = vmatprep.subr.bf16.mxu0 0
        %998 = vmatpush1.bf16.msra.mxu0 0
        %999 = vmatprep.subr.bf16.mxu0 0
        %1000 = vmatpush1.bf16.msra.mxu0 0
        %1001 = vmatprep.mubr.bf16.mxu0 0
        %1002 = vmatmul.mubr.bf16.gmra.mrb[0].mxu0 %v964
        %v1003 = vpop.f32.mrb[0].mxu0
        %v1004 = vadd.f32 0.0, %v1003
        %v1005 = vpop.f32.mrb[0].mxu0
        %v1006 = vpop.f32.mrb[0].mxu0
        %v1007 = vpop.f32.mrb[0].mxu0
        %1008 = vdwg.mxu0
        %1009 = vrot.lane.b32.xlu0 %v618, 64
        %v1010 = vpop.permute.xlu0 %1009
        %v1012 = vsel %vm622, %v863, 0
        %v1015 = vsel %vm869, %v1010, 0
        %1017 = vmatprep.subr.bf16.mxu0 0
        %1018 = vmatpush1.bf16.msra.mxu0 %v1015
        %1019 = vmatprep.subr.bf16.mxu0 0
        %1020 = vmatpush1.bf16.msra.mxu0 0
        %1021 = vmatprep.subr.bf16.mxu0 0
        %1022 = vmatpush1.bf16.msra.mxu0 0
        %1023 = vmatprep.subr.bf16.mxu0 0
        %1024 = vmatpush1.bf16.msra.mxu0 0
        %1025 = vmatprep.subr.bf16.mxu0 0
        %1026 = vmatpush1.bf16.msra.mxu0 0
        %1027 = vmatprep.subr.bf16.mxu0 0
        %1028 = vmatpush1.bf16.msra.mxu0 0
        %1029 = vmatprep.subr.bf16.mxu0 0
        %1030 = vmatpush1.bf16.msra.mxu0 0
        %1031 = vmatprep.subr.bf16.mxu0 0
        %1032 = vmatpush1.bf16.msra.mxu0 0
        %1033 = vmatprep.subr.bf16.mxu0 0
        %1034 = vmatpush1.bf16.msra.mxu0 0
        %1035 = vmatprep.subr.bf16.mxu0 0
        %1036 = vmatpush1.bf16.msra.mxu0 0
        %1037 = vmatprep.subr.bf16.mxu0 0
        %1038 = vmatpush1.bf16.msra.mxu0 0
        %1039 = vmatprep.subr.bf16.mxu0 0
        %1040 = vmatpush1.bf16.msra.mxu0 0
        %1041 = vmatprep.subr.bf16.mxu0 0
        %1042 = vmatpush1.bf16.msra.mxu0 0
        %1043 = vmatprep.subr.bf16.mxu0 0
        %1044 = vmatpush1.bf16.msra.mxu0 0
        %1045 = vmatprep.subr.bf16.mxu0 0
        %1046 = vmatpush1.bf16.msra.mxu0 0
        %1047 = vmatprep.subr.bf16.mxu0 0
        %1048 = vmatpush1.bf16.msra.mxu0 0
        %1049 = vmatprep.mubr.bf16.mxu0 0
        %1050 = vmatmul.mubr.bf16.gmra.mrb[0].mxu0 %v1012
        %v1051 = vpop.f32.mrb[0].mxu0
        %v1052 = vadd.f32 0.0, %v1051
        %v1053 = vpop.f32.mrb[0].mxu0
        %v1054 = vpop.f32.mrb[0].mxu0
        %v1055 = vpop.f32.mrb[0].mxu0
        %1056 = vdwg.mxu0
        %1058 = vrot.lane.b32.xlu0 %v956, 8
        %v1059 = vpop.permute.xlu0 %1058
        %1062 = vrot.lane.b32.xlu0 %v1004, 16
        %v1063 = vpop.permute.xlu0 %1062
        %1066 = vrot.lane.b32.xlu0 %v1052, 24
        %v1067 = vpop.permute.xlu0 %1066
        %v1069 = vsel %vm622, %v908, %v1059
        %vm1070 = vcmask 130048
        %v1071 = vsel %vm1070, %v1069, %v1063
        %vm1072 = vcmask 195584
        %v1073 = vsel %vm1072, %v1071, %v1067
        %v1074 = vpack.c.bf16 %v1073, %v1073
        %v1075 = vld [vmem:[%s5] sm:$0xf]
        %v1076 = vld [vmem:[%s5 + $0x4] sm:$0xf]
        %v1077 = vld [vmem:[%s5 + $0x8] sm:$0xf]
        %v1078 = vld [vmem:[%s5 + $0xc] sm:$0xf]
        %v1079 = vld [vmem:[%s6] sm:$0x1]
        %v1081 = vlaneseq
        %v1082 = vshrl.u32 %v1081, 7
        %v1083 = vsub.s32 0, %v1082
        %v1084 = vrot.slane %v1079, %v1083
        %v1090 = vunpack.c.l.b16 %v1075
        %v1091 = vunpack.c.l.b16 %v1076
        %v1092 = vunpack.c.l.b16 %v1077
        %v1093 = vunpack.c.l.b16 %v1078
        %v1094 = vpack.c.b16 %v1091, %v1090
        %v1095 = vpack.c.b16 %v1093, %v1092
        %v1099 = vsel %vm494, %v1074, 0
        %1101 = vmatprep.subr.bf16.mxu0 0
        %1102 = vmatpush1.bf16.msra.mxu0 %v1094
        %1103 = vmatprep.subr.bf16.mxu0 0
        %1104 = vmatpush1.bf16.msra.mxu0 %v1095
        %1105 = vmatprep.subr.bf16.mxu0 0
        %1106 = vmatpush1.bf16.msra.mxu0 0
        %1107 = vmatprep.subr.bf16.mxu0 0
        %1108 = vmatpush1.bf16.msra.mxu0 0
        %1109 = vmatprep.subr.bf16.mxu0 0
        %1110 = vmatpush1.bf16.msra.mxu0 0
        %1111 = vmatprep.subr.bf16.mxu0 0
        %1112 = vmatpush1.bf16.msra.mxu0 0
        %1113 = vmatprep.subr.bf16.mxu0 0
        %1114 = vmatpush1.bf16.msra.mxu0 0
        %1115 = vmatprep.subr.bf16.mxu0 0
        %1116 = vmatpush1.bf16.msra.mxu0 0
        %1117 = vmatprep.subr.bf16.mxu0 0
        %1118 = vmatpush1.bf16.msra.mxu0 0
        %1119 = vmatprep.subr.bf16.mxu0 0
        %1120 = vmatpush1.bf16.msra.mxu0 0
        %1121 = vmatprep.subr.bf16.mxu0 0
        %1122 = vmatpush1.bf16.msra.mxu0 0
        %1123 = vmatprep.subr.bf16.mxu0 0
        %1124 = vmatpush1.bf16.msra.mxu0 0
        %1125 = vmatprep.subr.bf16.mxu0 0
        %1126 = vmatpush1.bf16.msra.mxu0 0
        %1127 = vmatprep.subr.bf16.mxu0 0
        %1128 = vmatpush1.bf16.msra.mxu0 0
        %1129 = vmatprep.subr.bf16.mxu0 0
        %1130 = vmatpush1.bf16.msra.mxu0 0
        %1131 = vmatprep.subr.bf16.mxu0 0
        %1132 = vmatpush1.bf16.msra.mxu0 0
        %1133 = vmatprep.mubr.bf16.mxu0 0
        %1134 = vmatmul.mubr.bf16.gmra.mrb[0].mxu0 %v1099
        %v1135 = vpop.f32.mrb[0].mxu0
        %v1136 = vadd.f32 %v1084, %v1135
        %v1137 = vpop.f32.mrb[0].mxu0
        %v1138 = vpop.f32.mrb[0].mxu0
        %v1139 = vpop.f32.mrb[0].mxu0
        %1140 = vdwg.mxu0
        %v1141 = vpack.c.bf16 %v491, %v491
        %v1142 = vld [vmem:[%s7] sm:$0xf]
        %v1143 = vld [vmem:[%s7 + $0x4] sm:$0xf]
        %v1144 = vld [vmem:[%s7 + $0x8] sm:$0xf]
        %v1145 = vld [vmem:[%s7 + $0xc] sm:$0xf]
        %v1146 = vld [vmem:[%s8] sm:$0x1]
        %v1148 = vlaneseq
        %v1149 = vshrl.u32 %v1148, 7
        %v1150 = vsub.s32 0, %v1149
        %v1151 = vrot.slane %v1146, %v1150
        %v1157 = vunpack.c.l.b16 %v1142
        %v1158 = vunpack.c.l.b16 %v1143
        %v1159 = vunpack.c.l.b16 %v1144
        %v1160 = vunpack.c.l.b16 %v1145
        %v1161 = vpack.c.b16 %v1158, %v1157
        %v1162 = vpack.c.b16 %v1160, %v1159
        %v1166 = vsel %vm494, %v1141, 0
        %1168 = vmatprep.subr.bf16.mxu0 0
        %1169 = vmatpush1.bf16.msra.mxu0 %v1161
        %1170 = vmatprep.subr.bf16.mxu0 0
        %1171 = vmatpush1.bf16.msra.mxu0 %v1162
        %1172 = vmatprep.subr.bf16.mxu0 0
        %1173 = vmatpush1.bf16.msra.mxu0 0
        %1174 = vmatprep.subr.bf16.mxu0 0
        %1175 = vmatpush1.bf16.msra.mxu0 0
        %1176 = vmatprep.subr.bf16.mxu0 0
        %1177 = vmatpush1.bf16.msra.mxu0 0
        %1178 = vmatprep.subr.bf16.mxu0 0
        %1179 = vmatpush1.bf16.msra.mxu0 0
        %1180 = vmatprep.subr.bf16.mxu0 0
        %1181 = vmatpush1.bf16.msra.mxu0 0
        %1182 = vmatprep.subr.bf16.mxu0 0
        %1183 = vmatpush1.bf16.msra.mxu0 0
        %1184 = vmatprep.subr.bf16.mxu0 0
        %1185 = vmatpush1.bf16.msra.mxu0 0
        %1186 = vmatprep.subr.bf16.mxu0 0
        %1187 = vmatpush1.bf16.msra.mxu0 0
        %1188 = vmatprep.subr.bf16.mxu0 0
        %1189 = vmatpush1.bf16.msra.mxu0 0
        %1190 = vmatprep.subr.bf16.mxu0 0
        %1191 = vmatpush1.bf16.msra.mxu0 0
        %1192 = vmatprep.subr.bf16.mxu0 0
        %1193 = vmatpush1.bf16.msra.mxu0 0
        %1194 = vmatprep.subr.bf16.mxu0 0
        %1195 = vmatpush1.bf16.msra.mxu0 0
        %1196 = vmatprep.subr.bf16.mxu0 0
        %1197 = vmatpush1.bf16.msra.mxu0 0
        %1198 = vmatprep.subr.bf16.mxu0 0
        %1199 = vmatpush1.bf16.msra.mxu0 0
        %1200 = vmatprep.mubr.bf16.mxu0 0
        %1201 = vmatmul.mubr.bf16.gmra.mrb[0].mxu0 %v1166
        %v1202 = vpop.f32.mrb[0].mxu0
        %v1203 = vadd.f32 %v1151, %v1202
        %v1204 = vpop.f32.mrb[0].mxu0
        %v1205 = vpop.f32.mrb[0].mxu0
        %v1206 = vpop.f32.mrb[0].mxu0
        %1207 = vdwg.mxu0
        %v1208 = vxor.u32 %v1203, 2147483648
        %v1209 = vmul.f32 %v1208, 1.442695
        %v1210 = vpow.pop %v1209
        %v1211 = vadd.f32 %v1210, 1.0
        %v1212 = vrcp.pop %v1211
        %v1213 = vmul.f32 1.0, %v1212
        %v1214 = vmul.f32 %v1136, %v1213
        %v1215 = vadd.f32 %v491, %v1214
        %v1216 = vld [vmem:[%s9] sm:$0x1]
        %v1217 = vld [vmem:[%s10] sm:$0x1]
        %v1218 = vsel %vm494, %v1215, 0.0
        %1219 = vadd.xlane.f32.xlu0 %v1218
        %v1220 = vpop.xlane.xlu0 %1219
        %v1221 = vmul.f32 %v1220, %v498
        %v1222 = vsub.f32 %v1215, %v1221
        %v1223 = vmul.f32 %v1222, %v1222
        %v1224 = vsel %vm494, %v1223, 0.0
        %1225 = vadd.xlane.f32.xlu0 %v1224
        %v1226 = vpop.xlane.xlu0 %1225
        %v1227 = vmul.f32 %v1226, %v498
        %v1228 = vadd.f32 %v1227, 1e-05
        %v1229 = vrsqrt.pop %v1228
        %v1230 = vmul.f32 %v1222, %v1229
        %v1232 = vlaneseq
        %v1233 = vshrl.u32 %v1232, 7
        %v1234 = vsub.s32 0, %v1233
        %v1235 = vrot.slane %v1216, %v1234
        %v1237 = vmul.f32 %v1230, %v1235
        %v1239 = vlaneseq
        %v1240 = vshrl.u32 %v1239, 7
        %v1241 = vsub.s32 0, %v1240
        %v1242 = vrot.slane %v1217, %v1241
        %v1244 = vadd.f32 %v1237, %v1242
        %v1245 = vpack.c.bf16 %v1244, %v1244
        %v1246 = vld [vmem:[%s11] sm:$0xf]
        %v1247 = vld [vmem:[%s11 + $0x4] sm:$0xf]
        %v1248 = vld [vmem:[%s11 + $0x8] sm:$0xf]
        %v1249 = vld [vmem:[%s11 + $0xc] sm:$0xf]
        %v1250 = vld [vmem:[%s12] sm:$0x1]
        %v1252 = vlaneseq
        %v1253 = vshrl.u32 %v1252, 7
        %v1254 = vsub.s32 0, %v1253
        %v1255 = vrot.slane %v1250, %v1254
        %v1261 = vunpack.c.l.b16 %v1246
        %v1262 = vunpack.c.l.b16 %v1247
        %v1263 = vunpack.c.l.b16 %v1248
        %v1264 = vunpack.c.l.b16 %v1249
        %v1265 = vpack.c.b16 %v1262, %v1261
        %v1266 = vpack.c.b16 %v1264, %v1263
        %v1270 = vsel %vm494, %v1245, 0
        %1272 = vmatprep.subr.bf16.mxu0 0
        %1273 = vmatpush1.bf16.msra.mxu0 %v1265
        %1274 = vmatprep.subr.bf16.mxu0 0
        %1275 = vmatpush1.bf16.msra.mxu0 %v1266
        %1276 = vmatprep.subr.bf16.mxu0 0
        %1277 = vmatpush1.bf16.msra.mxu0 0
        %1278 = vmatprep.subr.bf16.mxu0 0
        %1279 = vmatpush1.bf16.msra.mxu0 0
        %1280 = vmatprep.subr.bf16.mxu0 0
        %1281 = vmatpush1.bf16.msra.mxu0 0
        %1282 = vmatprep.subr.bf16.mxu0 0
        %1283 = vmatpush1.bf16.msra.mxu0 0
        %1284 = vmatprep.subr.bf16.mxu0 0
        %1285 = vmatpush1.bf16.msra.mxu0 0
        %1286 = vmatprep.subr.bf16.mxu0 0
        %1287 = vmatpush1.bf16.msra.mxu0 0
        %1288 = vmatprep.subr.bf16.mxu0 0
        %1289 = vmatpush1.bf16.msra.mxu0 0
        %1290 = vmatprep.subr.bf16.mxu0 0
        %1291 = vmatpush1.bf16.msra.mxu0 0
        %1292 = vmatprep.subr.bf16.mxu0 0
        %1293 = vmatpush1.bf16.msra.mxu0 0
        %1294 = vmatprep.subr.bf16.mxu0 0
        %1295 = vmatpush1.bf16.msra.mxu0 0
        %1296 = vmatprep.subr.bf16.mxu0 0
        %1297 = vmatpush1.bf16.msra.mxu0 0
        %1298 = vmatprep.subr.bf16.mxu0 0
        %1299 = vmatpush1.bf16.msra.mxu0 0
        %1300 = vmatprep.subr.bf16.mxu0 0
        %1301 = vmatpush1.bf16.msra.mxu0 0
        %1302 = vmatprep.subr.bf16.mxu0 0
        %1303 = vmatpush1.bf16.msra.mxu0 0
        %1304 = vmatprep.mubr.bf16.mxu0 0
        %1305 = vmatmul.mubr.bf16.gmra.mrb[0].mxu0 %v1270
        %v1306 = vpop.f32.mrb[0].mxu0
        %v1307 = vadd.f32 %v1255, %v1306
        %v1308 = vpop.f32.mrb[0].mxu0
        %v1309 = vpop.f32.mrb[0].mxu0
        %v1310 = vpop.f32.mrb[0].mxu0
        %1311 = vdwg.mxu0
        %v1312 = vmul.f32 %v1307, 0.5
        %v1313 = vmul.f32 %v1307, 0.70710677
        %v1314 = vand.u32 2147483647, %v1313
        %v1315 = vmul.f32 %v1314, 0.3275911
        %v1316 = vadd.f32 %v1315, 1.0
        %v1317 = vrcp.pop %v1316
        %v1318 = vmul.f32 1.0, %v1317
        %v1319 = vmul.f32 %v1318, 1.0614054
        %v1320 = vadd.f32 %v1319, -1.4531521
        %v1321 = vmul.f32 %v1320, %v1318
        %v1322 = vadd.f32 %v1321, 1.4214138
        %v1323 = vmul.f32 %v1322, %v1318
        %v1324 = vadd.f32 %v1323, -0.28449672
        %v1325 = vmul.f32 %v1324, %v1318
        %v1326 = vadd.f32 %v1325, 0.2548296
        %v1327 = vmul.f32 %v1326, %v1318
        %v1328 = vsub.f32 0.0, %v1314
        %v1329 = vmul.f32 %v1328, %v1314
        %v1330 = vmul.f32 %v1329, 1.442695
        %v1331 = vpow.pop %v1330
        %v1332 = vmul.f32 %v1327, %v1331
        %v1333 = vsub.f32 1.0, %v1332
        %vm1334 = vcmp.ge.f32.partialorder %v1313, 0.0
        %v1335 = vsub.f32 0.0, %v1333
        %v1336 = vsel %vm1334, %v1333, %v1335
        %v1337 = vadd.f32 %v1336, 1.0
        %v1338 = vmul.f32 %v1312, %v1337
        %v1339 = vpack.c.bf16 %v1338, %v1338
        %v1340 = vld [vmem:[%s13] sm:$0xf]
        %v1341 = vld [vmem:[%s13 + $0x4] sm:$0xf]
        %v1342 = vld [vmem:[%s13 + $0x8] sm:$0xf]
        %v1343 = vld [vmem:[%s13 + $0xc] sm:$0xf]
        %v1344 = vld [vmem:[%s13 + $0x10] sm:$0xf]
        %v1345 = vld [vmem:[%s13 + $0x14] sm:$0xf]
        %v1346 = vld [vmem:[%s13 + $0x18] sm:$0xf]
        %v1347 = vld [vmem:[%s13 + $0x1c] sm:$0xf]
        %v1348 = vld [vmem:[%s13 + $0x20] sm:$0xf]
        %v1349 = vld [vmem:[%s13 + $0x24] sm:$0xf]
        %v1350 = vld [vmem:[%s13 + $0x28] sm:$0xf]
        %v1351 = vld [vmem:[%s13 + $0x2c] sm:$0xf]
        %v1352 = vld [vmem:[%s13 + $0x30] sm:$0xf]
        %v1353 = vld [vmem:[%s13 + $0x34] sm:$0xf]
        %v1354 = vld [vmem:[%s13 + $0x38] sm:$0xf]
        %v1355 = vld [vmem:[%s13 + $0x3c] sm:$0xf]
        %v1356 = vld [vmem:[%s14] sm:$0x1]
        %v1358 = vlaneseq
        %v1359 = vshrl.u32 %v1358, 7
        %v1360 = vsub.s32 0, %v1359
        %v1361 = vrot.slane %v1356, %v1360
        %v1379 = vunpack.c.l.b16 %v1340
        %v1380 = vunpack.c.l.b16 %v1341
        %v1381 = vunpack.c.l.b16 %v1342
        %v1382 = vunpack.c.l.b16 %v1343
        %v1383 = vunpack.c.l.b16 %v1344
        %v1384 = vunpack.c.l.b16 %v1345
        %v1385 = vunpack.c.l.b16 %v1346
        %v1386 = vunpack.c.l.b16 %v1347
        %v1387 = vunpack.c.l.b16 %v1348
        %v1388 = vunpack.c.l.b16 %v1349
        %v1389 = vunpack.c.l.b16 %v1350
        %v1390 = vunpack.c.l.b16 %v1351
        %v1391 = vunpack.c.l.b16 %v1352
        %v1392 = vunpack.c.l.b16 %v1353
        %v1393 = vunpack.c.l.b16 %v1354
        %v1394 = vunpack.c.l.b16 %v1355
        %v1395 = vpack.c.b16 %v1380, %v1379
        %v1396 = vpack.c.b16 %v1382, %v1381
        %v1397 = vpack.c.b16 %v1384, %v1383
        %v1398 = vpack.c.b16 %v1386, %v1385
        %v1399 = vpack.c.b16 %v1388, %v1387
        %v1400 = vpack.c.b16 %v1390, %v1389
        %v1401 = vpack.c.b16 %v1392, %v1391
        %v1402 = vpack.c.b16 %v1394, %v1393
        %1411 = vmatprep.subr.bf16.mxu0 0
        %1412 = vmatpush1.bf16.msra.mxu0 %v1395
        %1413 = vmatprep.subr.bf16.mxu0 0
        %1414 = vmatpush1.bf16.msra.mxu0 %v1396
        %1415 = vmatprep.subr.bf16.mxu0 0
        %1416 = vmatpush1.bf16.msra.mxu0 %v1397
        %1417 = vmatprep.subr.bf16.mxu0 0
        %1418 = vmatpush1.bf16.msra.mxu0 %v1398
        %1419 = vmatprep.subr.bf16.mxu0 0
        %1420 = vmatpush1.bf16.msra.mxu0 %v1399
        %1421 = vmatprep.subr.bf16.mxu0 0
        %1422 = vmatpush1.bf16.msra.mxu0 %v1400
        %1423 = vmatprep.subr.bf16.mxu0 0
        %1424 = vmatpush1.bf16.msra.mxu0 %v1401
        %1425 = vmatprep.subr.bf16.mxu0 0
        %1426 = vmatpush1.bf16.msra.mxu0 %v1402
        %1427 = vmatprep.subr.bf16.mxu0 0
        %1428 = vmatpush1.bf16.msra.mxu0 0
        %1429 = vmatprep.subr.bf16.mxu0 0
        %1430 = vmatpush1.bf16.msra.mxu0 0
        %1431 = vmatprep.subr.bf16.mxu0 0
        %1432 = vmatpush1.bf16.msra.mxu0 0
        %1433 = vmatprep.subr.bf16.mxu0 0
        %1434 = vmatpush1.bf16.msra.mxu0 0
        %1435 = vmatprep.subr.bf16.mxu0 0
        %1436 = vmatpush1.bf16.msra.mxu0 0
        %1437 = vmatprep.subr.bf16.mxu0 0
        %1438 = vmatpush1.bf16.msra.mxu0 0
        %1439 = vmatprep.subr.bf16.mxu0 0
        %1440 = vmatpush1.bf16.msra.mxu0 0
        %1441 = vmatprep.subr.bf16.mxu0 0
        %1442 = vmatpush1.bf16.msra.mxu0 0
        %1443 = vmatprep.mubr.bf16.mxu0 0
        %1444 = vmatmul.mubr.bf16.gmra.mrb[0].mxu0 %v1339
        %v1445 = vpop.f32.mrb[0].mxu0
        %v1446 = vadd.f32 %v1361, %v1445
        %v1447 = vpop.f32.mrb[0].mxu0
        %v1448 = vpop.f32.mrb[0].mxu0
        %v1449 = vpop.f32.mrb[0].mxu0
        %1450 = vdwg.mxu0
        %v1451 = vadd.f32 %v1215, %v1446
        %1452 = vst.msk [vmem:[%s485] sm:$0xff] %vm494, %v1451
        %s1453 = sand.u32 %s357, 1
        %s1454 = scalar_lea.sflag [#allocation3], %s1453
        %s1455 = sand.u32 %s357, 1
        %s1456 = smul.addr %s1455, 8
        %s1457 = scalar_lea.vmem [#allocation2], %s1456
        // Predicated region
        $region81: #{enhanced_transformer_block.1} parent=79 // pred_check
          %p1458 = pneg %p367
        $region82: #{enhanced_transformer_block.1} parent=79 // pred_check_branch
          %1460 = sbr.rel (%p1458) target = $region84
        $region83: #{enhanced_transformer_block.1} parent=79 // pred_region
          %s1462 = ssub.s32 128, 128
          %1463 = vsyncadd %s1454, %s1462
          %s1464 = smul.addr %s29, 128
          %s1465 = scalar_lea.hbm %s15, %s1464
          %s1467 = sshll.u32 %s1457, 4
          %s1468 = int_to_ptr.vmem [resolvable:$true] %s1467
          %1470 = dma.vmem_to_hbm [thread:$0]  %s1468, 128, %s1465, %s1454
        $region84: #{enhanced_transformer_block.1} parent=79 // pred_fallthru
          _
      $region80: #{enhanced_transformer_block.1} parent=5 // pred_fallthru
        _
      %p1471 = scmp.le.s32.totalorder 2, %s24
      // Predicated region
      $region85: #{enhanced_transformer_block.1} parent=5 // pred_check
        %p1472 = pneg %p1471
      $region86: #{enhanced_transformer_block.1} parent=5 // pred_check_branch
        %1474 = sbr.rel (%p1472) target = $region88
      $region87: #{enhanced_transformer_block.1} parent=5 // pred_region
        %s1475 = ssub.s32 %s24, 2
        // Predicated region
        $region89: #{enhanced_transformer_block.1} parent=87 // pred_check
          %p1476 = pneg %p373
        $region90: #{enhanced_transformer_block.1} parent=87 // pred_check_branch
          %1478 = sbr.rel (%p1476) target = $region92
        $region91: #{enhanced_transformer_block.1} parent=87 // pred_region
          %s1479 = sand.u32 %s358, 1
          %s1480 = scalar_lea.sflag [#allocation3], %s1479
          %s1481 = sand.u32 %s358, 1
          %s1482 = smul.addr %s1481, 8
          %s1483 = scalar_lea.vmem [#allocation2], %s1482
          %1484 = dma.done %s1480, 128
        $region92: #{enhanced_transformer_block.1} parent=87 // pred_fallthru
          _
      $region88: #{enhanced_transformer_block.1} parent=5 // pred_fallthru
        _
    $region6: #{enhanced_transformer_block.1} parent=1 // loop_footer
      %s28 = sadd.s32 1, %s24
    $region7: #{enhanced_transformer_block.1} parent=1 // loop_footer_branch
      %23 = sbr.rel target = $region3
    $region8: #{enhanced_transformer_block.1} parent=1 // loop_exit
      _
    %1485 = vsyncpa [#allocation3], 1
    %s1486 = scalar_lea.sflag [#allocation3], 1
    %1487 = vsyncpa %s1486, 1

</llo_original>
